<compile_context>
chip_gen: v7x
topology: tpu7x:2x2x1
jax: 0.10.0
libtpu: 0.0.40
codegen_flags: <defaults>
</compile_context>

<pallas_src>
import functools

import jax
import jax.numpy as jnp
from jax.experimental import pallas as pl
from jax.experimental.pallas import tpu as pltpu

HID1, HID2 = 400, 300          # logical hidden sizes (PyTorch spec)
HID1_PAD, HID2_PAD = 512, 384  # lane-aligned (multiples of 128)
_MIN_SPLIT = 256               # only split the batch if each piece >= this


def _round_up(n: int, m: int) -> int:
    return ((n + m - 1) // m) * m


def _probe_single_buffered():
    """One-time capability probe: does this jax/Mosaic build accept
    pipeline_mode=pl.Buffered(1) on a pallas_call BlockSpec?  Weight/bias
    blocks are constant across the grid, so single-buffering them halves
    their VMEM footprint.  Fall back to default double-buffering if the
    API / lowering rejects it (keeps the kernel runnable everywhere)."""
    try:
        mode = pl.Buffered(1)

        def _k(x_ref, o_ref):
            o_ref[...] = x_ref[...] * 2.0

        fn = pl.pallas_call(
            _k,
            out_shape=jax.ShapeDtypeStruct((16, 128), jnp.float32),
            grid=(2,),
            in_specs=[pl.BlockSpec((8, 128), lambda i: (0, 0),
                                   pipeline_mode=mode)],
            out_specs=pl.BlockSpec((8, 128), lambda i: (i, 0)),
        )
        jax.block_until_ready(fn(jnp.ones((8, 128), jnp.float32)))
        return mode
    except Exception:
        return None


_CONST_BLOCK_MODE = _probe_single_buffered()


def _const_spec(shape):
    """BlockSpec for an array fetched once (same block every grid step)."""
    if _CONST_BLOCK_MODE is not None:
        return pl.BlockSpec(shape, lambda i: (0, 0),
                            pipeline_mode=_CONST_BLOCK_MODE)
    return pl.BlockSpec(shape, lambda i: (0, 0))


def _actor_kernel(x_ref, w1_ref, b1_ref, w2_ref, b2_ref, w3_ref, b3_ref,
                  out_ref, *, max_action: float):
    # Layer 1: [TB,S]bf16 @ [S,512]bf16 -> f32 acc; bias+ReLU+bf16 cast fused
    # into one elementwise pass (only one copy of h1 materialized).
    h1 = jnp.dot(x_ref[...], w1_ref[...], preferred_element_type=jnp.float32)
    h1 = jnp.maximum(h1 + b1_ref[...], 0.0).astype(jnp.bfloat16)
    # Layer 2: [TB,512] @ [512,384] (bf16 operands, f32 acc), fused epilogue.
    h2 = jnp.dot(h1, w2_ref[...], preferred_element_type=jnp.float32)
    h2 = jnp.maximum(h2 + b2_ref[...], 0.0).astype(jnp.bfloat16)
    # Layer 3: [TB,384] @ [384,A_pad] -> Tanh -> scale (f32 elementwise).
    a = jnp.dot(h2, w3_ref[...], preferred_element_type=jnp.float32)
    out_ref[...] = (max_action * jnp.tanh(a + b3_ref[...])).astype(out_ref.dtype)


@functools.partial(jax.jit,
                   static_argnames=("action_dim", "max_action", "batch_tile"))
def actor_forward(state, params, *, action_dim: int, max_action: float,
                  batch_tile: int = 512):
    """state: [B, state_dim] float32; params: padded/bf16 dict (see below)."""
    w1, b1, w2, b2, w3, b3 = (params["w1"], params["b1"], params["w2"],
                              params["b2"], params["w3"], params["b3"])
    B, S = state.shape
    A_pad = w3.shape[1]

    # --- Batch tiling ------------------------------------------------------
    # * multiples of 16 rows (bf16 sublane packing),
    # * per-step tile capped at batch_tile (v5e scoped-VMEM headroom),
    # * >=2 "parallel" grid steps whenever B >= 2*_MIN_SPLIT so v7x's two
    #   TensorCores both run and step i+1 DMAs overlap step i compute.
    batch_tile = max(16, _round_up(batch_tile, 16))
    B16 = _round_up(max(B, 16), 16)
    n_steps = pl.cdiv(B16, batch_tile)
    if n_steps < 2 and B16 >= 2 * _MIN_SPLIT:
        n_steps = 2
    TB = _round_up(pl.cdiv(B16, n_steps), 16)
    B_pad = TB * n_steps

    x = state.astype(jnp.bfloat16)
    if B_pad != B:
        x = jnp.pad(x, ((0, B_pad - B), (0, 0)))

    # Advisory cost hint for XLA's scheduler (padded work actually done).
    flops = 2 * B_pad * (S * HID1_PAD + HID1_PAD * HID2_PAD + HID2_PAD * A_pad)
    bytes_accessed = (x.size * 2                            # bf16 activations
                      + (w1.size + w2.size + w3.size) * 2   # bf16 weights
                      + (b1.size + b2.size + b3.size) * 4   # f32 biases
                      + B_pad * A_pad * 4)                  # f32 output
    cost = pl.CostEstimate(flops=flops,
                           transcendentals=B_pad * A_pad,
                           bytes_accessed=bytes_accessed)

    kernel = functools.partial(_actor_kernel, max_action=float(max_action))
    out = pl.pallas_call(
        kernel,
        out_shape=jax.ShapeDtypeStruct((B_pad, A_pad), jnp.float32),
        grid=(n_steps,),
        in_specs=[
            pl.BlockSpec((TB, S), lambda i: (i, 0)),   # x tile (S = full dim)
            _const_spec(w1.shape), _const_spec(b1.shape),   # weights/biases:
            _const_spec(w2.shape), _const_spec(b2.shape),   # whole arrays,
            _const_spec(w3.shape), _const_spec(b3.shape),   # fetched once
        ],
        out_specs=pl.BlockSpec((TB, A_pad), lambda i: (i, 0)),  # lane-dense
        compiler_params=pltpu.CompilerParams(
            dimension_semantics=("parallel",)),
        cost_estimate=cost,
    )(x, w1, b1, w2, b2, w3, b3)

    # TODO(synk): if the consumer tolerates bf16 / padded outputs, emit bf16
    # and skip this eager slice (saves an extra HBM round trip).
    return out[:B, :action_dim]


def prepare_actor_params(w1, b1, w2, b2, w3, b3):
    """Pad weights/biases to lane-aligned shapes (once) and cast matmul
    operands to bf16. Biases stay f32 (added after f32 accumulation).
    Padding is with zeros, so padded columns/rows contribute nothing.
    Note: state_dim (contraction dim of layer 1) is deliberately NOT padded
    to 128 — layer 1 is <7% of FLOPs and padding K only adds dead MXU cycles."""
    S = w1.shape[0]
    A = w3.shape[1]
    A_pad = _round_up(A, 128)

    def pad_to(x, shape):
        return jnp.zeros(shape, x.dtype).at[
            tuple(slice(0, s) for s in x.shape)].set(x)

    params = {
        "w1": pad_to(w1, (S, HID1_PAD)).astype(jnp.bfloat16),
        "b1": pad_to(b1.reshape(1, -1), (1, HID1_PAD)).astype(jnp.float32),
        "w2": pad_to(w2, (HID1_PAD, HID2_PAD)).astype(jnp.bfloat16),
        "b2": pad_to(b2.reshape(1, -1), (1, HID2_PAD)).astype(jnp.float32),
        "w3": pad_to(w3, (HID2_PAD, A_pad)).astype(jnp.bfloat16),
        "b3": pad_to(b3.reshape(1, -1), (1, A_pad)).astype(jnp.float32),
    }
    return params, A


def init_actor_params(key, state_dim: int, action_dim: int):
    """Deterministic synthetic init (uniform, PyTorch-Linear-style bounds),
    unpadded f32 weights in [in, out] layout."""
    dims = [(state_dim, HID1), (HID1, HID2), (HID2, action_dim)]
    raw = {}
    keys = jax.random.split(key, 2 * len(dims))
    for i, (fan_in, fan_out) in enumerate(dims):
        bound = 1.0 / jnp.sqrt(jnp.float32(fan_in))
        raw[f"w{i+1}"] = jax.random.uniform(
            keys[2 * i], (fan_in, fan_out), jnp.float32, -bound, bound)
        raw[f"b{i+1}"] = jax.random.uniform(
            keys[2 * i + 1], (1, fan_out), jnp.float32, -bound, bound)
    return raw


def _reference_bf16(state, raw, max_action):
    """Plain-JAX reference with identical bf16-operand / f32-accumulate math."""
    xb = state.astype(jnp.bfloat16)
    h1 = jnp.maximum(
        jnp.dot(xb, raw["w1"].astype(jnp.bfloat16),
                preferred_element_type=jnp.float32) + raw["b1"], 0.0)
    h2 = jnp.maximum(
        jnp.dot(h1.astype(jnp.bfloat16), raw["w2"].astype(jnp.bfloat16),
                preferred_element_type=jnp.float32) + raw["b2"], 0.0)
    return max_action * jnp.tanh(
        jnp.dot(h2.astype(jnp.bfloat16), raw["w3"].astype(jnp.bfloat16),
                preferred_element_type=jnp.float32) + raw["b3"])


if __name__ == "__main__":
    state_dim = 32
    action_dim = 8
    batch = 8
    max_action = 2.0

    key = jax.random.PRNGKey(0)
    k_params, k_state, k_big = jax.random.split(key, 3)
    raw = init_actor_params(k_params, state_dim, action_dim)
    params, _ = prepare_actor_params(raw["w1"], raw["b1"], raw["w2"],
                                     raw["b2"], raw["w3"], raw["b3"])
    state = jax.random.normal(k_state, (batch, state_dim), jnp.float32)

    out = actor_forward(state, params, action_dim=action_dim,
                        max_action=max_action)
    out = jax.block_until_ready(out)
    assert out.shape == (batch, action_dim)

    # Reference in plain JAX with the same bf16-operand / f32-accumulate math.
    ref = _reference_bf16(state, raw, max_action)
    assert jnp.allclose(out, ref, atol=2e-3, rtol=2e-3)

    # Full-precision (PyTorch-semantics) sanity check, looser tolerance.
    h1f = jnp.maximum(state @ raw["w1"] + raw["b1"], 0.0)
    h2f = jnp.maximum(h1f @ raw["w2"] + raw["b2"], 0.0)
    reff = max_action * jnp.tanh(h2f @ raw["w3"] + raw["b3"])
    assert jnp.allclose(out, reff, atol=5e-2, rtol=5e-2)

    # Exercise the multi-step (>=2 parallel grid steps) path with padding.
    big_batch = 600
    state_big = jax.random.normal(k_big, (big_batch, state_dim), jnp.float32)
    out_big = jax.block_until_ready(
        actor_forward(state_big, params, action_dim=action_dim,
                      max_action=max_action))
    assert out_big.shape == (big_batch, action_dim)
    ref_big = _reference_bf16(state_big, raw, max_action)
    assert jnp.allclose(out_big, ref_big, atol=5e-3, rtol=5e-3)

    print("KERNEL_OK")
</pallas_src>

<mosaic_0001>
module attributes {stable_mosaic.version = 11 : i64} {
  func.func @_k(%arg0: i32, %arg1: memref<8x128xf32, #tpu.memory_space<vmem>>, %arg2: memref<8x128xf32, #tpu.memory_space<vmem>>) attributes {dimension_semantics = [#tpu.dimension_semantics<arbitrary>], iteration_bounds = array<i64: 2>, scalar_prefetch = 0 : i64, scratch_operands = 0 : i64, tpu.core_type = #tpu.core_type<tc>, window_params = [{pipeline_mode = #tpu.pipeline_mode<synchronous>, transform_indices = @transform_0, window_bounds = array<i64: 8, 128>}, {transform_indices = @transform_1, window_bounds = array<i64: 8, 128>}]} {
    %c0 = arith.constant 0 : index
    %c0_0 = arith.constant 0 : index
    %0 = vector.load %arg1[%c0, %c0_0] : memref<8x128xf32, #tpu.memory_space<vmem>>, vector<8x128xf32>
    %cst = arith.constant 2.000000e+00 : f32
    %1 = vector.broadcast %cst : f32 to vector<8x128xf32>
    %2 = arith.mulf %0, %1 : vector<8x128xf32>
    %c0_1 = arith.constant 0 : index
    %c0_2 = arith.constant 0 : index
    %3 = vector.load %arg2[%c0_1, %c0_2] : memref<8x128xf32, #tpu.memory_space<vmem>>, vector<8x128xf32>
    tpu.vector_store %arg2[%c0_1, %c0_2], %2 {strides = array<i32>} : memref<8x128xf32, #tpu.memory_space<vmem>>, vector<8x128xf32>,
    return
  }
  func.func @transform_0(%arg0: i32) -> (i32, i32) {
    %c0_i32 = arith.constant 0 : i32
    %c0_i32_0 = arith.constant 0 : i32
    %c0_i32_1 = arith.constant 0 : i32
    return %c0_i32, %c0_i32_0 : i32, i32
  }
  func.func @transform_1(%arg0: i32) -> (i32, i32) {
    %c0_i32 = arith.constant 0 : i32
    %c0_i32_0 = arith.constant 0 : i32
    return %arg0, %c0_i32 : i32, i32
  }
}

module attributes {stable_mosaic.version = 11 : i64} {
  func.func @_actor_kernel(%arg0: i32, %arg1: memref<16x32xbf16, #tpu.memory_space<vmem>>, %arg2: memref<32x512xbf16, #tpu.memory_space<vmem>>, %arg3: memref<1x512xf32, #tpu.memory_space<vmem>>, %arg4: memref<512x384xbf16, #tpu.memory_space<vmem>>, %arg5: memref<1x384xf32, #tpu.memory_space<vmem>>, %arg6: memref<384x128xbf16, #tpu.memory_space<vmem>>, %arg7: memref<1x128xf32, #tpu.memory_space<vmem>>, %arg8: memref<16x128xf32, #tpu.memory_space<vmem>>) attributes {dimension_semantics = [#tpu.dimension_semantics<parallel>], iteration_bounds = array<i64: 1>, scalar_prefetch = 0 : i64, scratch_operands = 0 : i64, tpu.core_type = #tpu.core_type<tc>, window_params = [{transform_indices = @transform_0, window_bounds = array<i64: 16, 32>}, {pipeline_mode = #tpu.pipeline_mode<synchronous>, transform_indices = @transform_1, window_bounds = array<i64: 32, 512>}, {pipeline_mode = #tpu.pipeline_mode<synchronous>, transform_indices = @transform_2, window_bounds = array<i64: 1, 512>}, {pipeline_mode = #tpu.pipeline_mode<synchronous>, transform_indices = @transform_3, window_bounds = array<i64: 512, 384>}, {pipeline_mode = #tpu.pipeline_mode<synchronous>, transform_indices = @transform_4, window_bounds = array<i64: 1, 384>}, {pipeline_mode = #tpu.pipeline_mode<synchronous>, transform_indices = @transform_5, window_bounds = array<i64: 384, 128>}, {pipeline_mode = #tpu.pipeline_mode<synchronous>, transform_indices = @transform_6, window_bounds = array<i64: 1, 128>}, {transform_indices = @transform_7, window_bounds = array<i64: 16, 128>}]} {
    %c0 = arith.constant 0 : index
    %c0_0 = arith.constant 0 : index
    %0 = vector.load %arg1[%c0, %c0_0] : memref<16x32xbf16, #tpu.memory_space<vmem>>, vector<16x32xbf16>
    %c0_1 = arith.constant 0 : index
    %c0_2 = arith.constant 0 : index
    %1 = vector.load %arg2[%c0_1, %c0_2] : memref<32x512xbf16, #tpu.memory_space<vmem>>, vector<32x512xbf16>
    %cst = arith.constant dense<0.000000e+00> : vector<16x512xf32>
    %2 = tpu.matmul %0, %1, %cst {dimension_numbers = #tpu.dot_dimension_numbers<[1], [0], [0], [1], [0, 0, 1, 1], [], []>} : vector<16x32xbf16>, vector<32x512xbf16>, vector<16x512xf32> -> vector<16x512xf32>
    %c0_3 = arith.constant 0 : index
    %c0_4 = arith.constant 0 : index
    %3 = vector.load %arg3[%c0_3, %c0_4] : memref<1x512xf32, #tpu.memory_space<vmem>>, vector<1x512xf32>
    %4 = vector.broadcast %3 : vector<1x512xf32> to vector<16x512xf32>
    %5 = arith.addf %2, %4 : vector<16x512xf32>
    %cst_5 = arith.constant 0.000000e+00 : f32
    %6 = vector.broadcast %cst_5 : f32 to vector<16x512xf32>
    %7 = arith.maximumf %5, %6 : vector<16x512xf32>
    %8 = arith.truncf %7 : vector<16x512xf32> to vector<16x512xbf16>
    %c0_6 = arith.constant 0 : index
    %c0_7 = arith.constant 0 : index
    %9 = vector.load %arg4[%c0_6, %c0_7] : memref<512x384xbf16, #tpu.memory_space<vmem>>, vector<512x384xbf16>
    %cst_8 = arith.constant dense<0.000000e+00> : vector<16x384xf32>
    %10 = tpu.matmul %8, %9, %cst_8 {dimension_numbers = #tpu.dot_dimension_numbers<[1], [0], [0], [1], [0, 0, 1, 1], [], []>} : vector<16x512xbf16>, vector<512x384xbf16>, vector<16x384xf32> -> vector<16x384xf32>
    %c0_9 = arith.constant 0 : index
    %c0_10 = arith.constant 0 : index
    %11 = vector.load %arg5[%c0_9, %c0_10] : memref<1x384xf32, #tpu.memory_space<vmem>>, vector<1x384xf32>
    %12 = vector.broadcast %11 : vector<1x384xf32> to vector<16x384xf32>
    %13 = arith.addf %10, %12 : vector<16x384xf32>
    %cst_11 = arith.constant 0.000000e+00 : f32
    %14 = vector.broadcast %cst_11 : f32 to vector<16x384xf32>
    %15 = arith.maximumf %13, %14 : vector<16x384xf32>
    %16 = arith.truncf %15 : vector<16x384xf32> to vector<16x384xbf16>
    %c0_12 = arith.constant 0 : index
    %c0_13 = arith.constant 0 : index
    %17 = vector.load %arg6[%c0_12, %c0_13] : memref<384x128xbf16, #tpu.memory_space<vmem>>, vector<384x128xbf16>
    %cst_14 = arith.constant dense<0.000000e+00> : vector<16x128xf32>
    %18 = tpu.matmul %16, %17, %cst_14 {dimension_numbers = #tpu.dot_dimension_numbers<[1], [0], [0], [1], [0, 0, 1, 1], [], []>} : vector<16x384xbf16>, vector<384x128xbf16>, vector<16x128xf32> -> vector<16x128xf32>
    %c0_15 = arith.constant 0 : index
    %c0_16 = arith.constant 0 : index
    %19 = vector.load %arg7[%c0_15, %c0_16] : memref<1x128xf32, #tpu.memory_space<vmem>>, vector<1x128xf32>
    %20 = vector.broadcast %19 : vector<1x128xf32> to vector<16x128xf32>
    %21 = arith.addf %18, %20 : vector<16x128xf32>
    %22 = math.tanh %21 : vector<16x128xf32>
    %cst_17 = arith.constant 2.000000e+00 : f32
    %23 = vector.broadcast %cst_17 : f32 to vector<16x128xf32>
    %24 = arith.mulf %23, %22 : vector<16x128xf32>
    %c0_18 = arith.constant 0 : index
    %c0_19 = arith.constant 0 : index
    %25 = vector.load %arg8[%c0_18, %c0_19] : memref<16x128xf32, #tpu.memory_space<vmem>>, vector<16x128xf32>
    tpu.vector_store %arg8[%c0_18, %c0_19], %24 {strides = array<i32>} : memref<16x128xf32, #tpu.memory_space<vmem>>, vector<16x128xf32>,
    return
  }
  func.func @transform_0(%arg0: i32) -> (i32, i32) {
    %c0_i32 = arith.constant 0 : i32
    %c0_i32_0 = arith.constant 0 : i32
    return %arg0, %c0_i32 : i32, i32
  }
  func.func @transform_1(%arg0: i32) -> (i32, i32) {
    %c0_i32 = arith.constant 0 : i32
    %c0_i32_0 = arith.constant 0 : i32
    %c0_i32_1 = arith.constant 0 : i32
    return %c0_i32, %c0_i32_0 : i32, i32
  }
  func.func @transform_2(%arg0: i32) -> (i32, i32) {
    %c0_i32 = arith.constant 0 : i32
    %c0_i32_0 = arith.constant 0 : i32
    %c0_i32_1 = arith.constant 0 : i32
    return %c0_i32, %c0_i32_0 : i32, i32
  }
  func.func @transform_3(%arg0: i32) -> (i32, i32) {
    %c0_i32 = arith.constant 0 : i32
    %c0_i32_0 = arith.constant 0 : i32
    %c0_i32_1 = arith.constant 0 : i32
    return %c0_i32, %c0_i32_0 : i32, i32
  }
  func.func @transform_4(%arg0: i32) -> (i32, i32) {
    %c0_i32 = arith.constant 0 : i32
    %c0_i32_0 = arith.constant 0 : i32
    %c0_i32_1 = arith.constant 0 : i32
    return %c0_i32, %c0_i32_0 : i32, i32
  }
  func.func @transform_5(%arg0: i32) -> (i32, i32) {
    %c0_i32 = arith.constant 0 : i32
    %c0_i32_0 = arith.constant 0 : i32
    %c0_i32_1 = arith.constant 0 : i32
    return %c0_i32, %c0_i32_0 : i32, i32
  }
  func.func @transform_6(%arg0: i32) -> (i32, i32) {
    %c0_i32 = arith.constant 0 : i32
    %c0_i32_0 = arith.constant 0 : i32
    %c0_i32_1 = arith.constant 0 : i32
    return %c0_i32, %c0_i32_0 : i32, i32
  }
  func.func @transform_7(%arg0: i32) -> (i32, i32) {
    %c0_i32 = arith.constant 0 : i32
    %c0_i32_0 = arith.constant 0 : i32
    return %arg0, %c0_i32 : i32, i32
  }
}

</mosaic_0001>

<llo_original>
// kernel: tpu_custom_call.1
$region0: #{tpu_custom_call.1}
  #allocation0 [shape = 'u32[]', space=smem, size = 0x4, offset = 0x4, fixed_abs, tag = 'smem constant byte address 0x4 - core index']
  #allocation1 [shape = 'u32[144,128]{1,0:T(1,128)}', space=vmem, size = 0x12000, scoped, tag = 'internal scratch']
  %s0 = inlined_call_operand.hbm [shape: f32[8,128], index: 0, kind: input, shape index: {}]
  %s1 = inlined_call_operand.hbm [shape: f32[16,128], index: 1, kind: output, shape index: {}]
  %s2 = sld [smem:[#allocation0]]
  $region41: #{tpu_custom_call.1} parent=0
    _
  %s4 = ssub.s32 1, %s2
  %s5 = scalar_select 0, %s4, %s2
  $region1: #{tpu_custom_call.1} parent=0
    #allocation2 [shape = 'u8[4096]{0}', space=vmem, size = 0x1000, scoped, tag = 'input window, operand 0, single buffered']
    #allocation3 [shape = 's32[2]{0}', space=sflag, size = 0x8, scoped, tag = 'scoped memory for tpu_custom_call.1']
    #allocation4 [shape = 's32[2]{0}', space=sflag, size = 0x8, scoped, tag = 'scoped memory for tpu_custom_call.1']
    #allocation5 [shape = 'u8[8192]{0}', space=vmem, size = 0x2000, scoped, tag = 'output window, operand 0']
    %6 = vsyncpa [#allocation3], 0
    %7 = vsyncpa [#allocation4], 0
    %s8 = scalar_lea.sflag [#allocation4], 1
    %9 = vsyncpa %s8, 0
    loop: start=0, step=1, limit=4
    $region2: #{tpu_custom_call.1} parent=1 // loop_pre_header
      _
    $region3: #{tpu_custom_call.1} parent=1 // loop_header
      %s11 = sphi 0, %s15
      %p12 = scmp.ge.s32.totalorder %s11, 4
      %s19 = sphi 0, %s19
      %s21 = sphi 0, %s19
      %s22 = sphi 0, %s21
      %s36 = sphi 0, %s22
      %s42 = sphi 0, %s44
      %s45 = sphi 0, %s42
      %s46 = sphi 0, %s45
      %s62 = sphi 0, %s46
    $region4: #{tpu_custom_call.1} parent=1 // loop_header_branch
      %14 = sbr.rel (%p12) target = $region8
    $region5: #{tpu_custom_call.1} parent=1 // loop_body
      %s16 = ssub.s32 %s11, 1
      %s17 = ssub.s32 %s11, 2
      %s18 = sadd.s32 %s11, 1
      %s20 = sadd.s32 %s19, 1
      %p23 = scmp.eq.s32.totalorder %s11, 1
      %p24 = scmp.ne.s32.totalorder %s19, %s21
      %p25 = scmp.eq.s32.totalorder %s11, 0
      %p26 = por %p24, %p25
      %p27 = scmp.ne.s32.totalorder %s19, %s21
      %p28 = scmp.eq.s32.totalorder %s16, 1
      %p29 = por %p27, %p28
      %p30 = scmp.ne.s32.totalorder %s21, %s22
      %p31 = scmp.eq.s32.totalorder %s16, 0
      %p32 = por %p30, %p31
      %p33 = scmp.ne.s32.totalorder %s21, %s22
      %p34 = scmp.eq.s32.totalorder %s17, 1
      %p35 = por %p33, %p34
      %p37 = scmp.ne.s32.totalorder %s22, %s36
      %p38 = scmp.eq.s32.totalorder %s17, 0
      %p39 = por %p37, %p38
      %s40 = ssub.s32 %s11, %s18
      %p41 = scmp.eq.s32.totalorder %s40, 0
      %s43 = sadd.s32 %s42, 1
      %s44 = scalar_select %p41, %s42, %s43
      %p47 = pneg %p41
      %p48 = scmp.eq.s32.totalorder %s11, 1
      %p49 = por %p47, %p48
      %p50 = scmp.ne.s32.totalorder %s42, %s45
      %p51 = scmp.eq.s32.totalorder %s11, 0
      %p52 = por %p50, %p51
      %p53 = scmp.ne.s32.totalorder %s42, %s45
      %p54 = scmp.eq.s32.totalorder %s16, 1
      %p55 = por %p53, %p54
      %p56 = scmp.ne.s32.totalorder %s45, %s46
      %p57 = scmp.eq.s32.totalorder %s16, 0
      %p58 = por %p56, %p57
      %p59 = scmp.ne.s32.totalorder %s45, %s46
      %p60 = scmp.eq.s32.totalorder %s17, 1
      %p61 = por %p59, %p60
      %p63 = scmp.ne.s32.totalorder %s46, %s62
      %p64 = scmp.eq.s32.totalorder %s17, 0
      %p65 = por %p63, %p64
      %p66 = scmp.le.s32.totalorder 1, %s11
      %p67 = scmp.lt.s32.totalorder %s11, 3
      %p68 = pnand %p66, %p67
      %p69 = pneg %p68
      // Predicated region
      $region9: #{tpu_custom_call.1} parent=5 // pred_check
        _
      $region10: #{tpu_custom_call.1} parent=5 // pred_check_branch
        %71 = sbr.rel (%p68) target = $region12
      $region11: #{tpu_custom_call.1} parent=5 // pred_region
        %s72 = ssub.s32 %s11, 1
        // Predicated region
        $region13: #{tpu_custom_call.1} parent=11 // pred_check
          %p73 = pneg %p32
        $region14: #{tpu_custom_call.1} parent=11 // pred_check_branch
          %75 = sbr.rel (%p73) target = $region16
        $region15: #{tpu_custom_call.1} parent=11 // pred_region
          %s77 = ssub.s32 128, 128
          %78 = vsyncadd [#allocation3], %s77
          %s80 = sshll.u32 [#allocation2], 4
          %s81 = int_to_ptr.vmem [resolvable:$true] %s80
          %83 = dma.hbm_to_vmem [thread:$0]  %s0, 128, %s81, [#allocation3]
        $region16: #{tpu_custom_call.1} parent=11 // pred_fallthru
          _
      $region12: #{tpu_custom_call.1} parent=5 // pred_fallthru
        _
      %p84 = scmp.lt.s32.totalorder %s11, 2
      // Predicated region
      $region17: #{tpu_custom_call.1} parent=5 // pred_check
        %p85 = pneg %p84
      $region18: #{tpu_custom_call.1} parent=5 // pred_check_branch
        %87 = sbr.rel (%p85) target = $region20
      $region19: #{tpu_custom_call.1} parent=5 // pred_region
        _
      $region20: #{tpu_custom_call.1} parent=5 // pred_fallthru
        _
      %p88 = scmp.le.s32.totalorder 1, %s11
      %p89 = scmp.lt.s32.totalorder %s11, 3
      %p90 = pnand %p88, %p89
      %p91 = pneg %p90
      // Predicated region
      $region21: #{tpu_custom_call.1} parent=5 // pred_check
        _
      $region22: #{tpu_custom_call.1} parent=5 // pred_check_branch
        %93 = sbr.rel (%p90) target = $region24
      $region23: #{tpu_custom_call.1} parent=5 // pred_region
        %s94 = ssub.s32 %s11, 1
        // Predicated region
        $region25: #{tpu_custom_call.1} parent=23 // pred_check
          %p95 = pneg %p32
        $region26: #{tpu_custom_call.1} parent=23 // pred_check_branch
          %97 = sbr.rel (%p95) target = $region28
        $region27: #{tpu_custom_call.1} parent=23 // pred_region
          %98 = dma.done [#allocation3], 128
        $region28: #{tpu_custom_call.1} parent=23 // pred_fallthru
          _
        %p99 = pneg %p32
        %p100 = pneg %p29
        %p101 = pneg %p58
        %p102 = pneg %p55
        %s103 = sand.u32 %s45, 1
        %s104 = scalar_lea.sflag [#allocation4], %s103
        %s105 = sand.u32 %s45, 1
        %s106 = smul.addr %s105, 8
        %s107 = scalar_lea.vmem [#allocation5], %s106
        %v108 = vld [vmem:[#allocation2] sm:$0xff]
        %v109 = vmul.f32 %v108, 2.0
        %110 = vst [vmem:[%s107] sm:$0xff] %v109
        %s111 = sand.u32 %s45, 1
        %s112 = scalar_lea.sflag [#allocation4], %s111
        %s113 = sand.u32 %s45, 1
        %s114 = smul.addr %s113, 8
        %s115 = scalar_lea.vmem [#allocation5], %s114
        // Predicated region
        $region29: #{tpu_custom_call.1} parent=23 // pred_check
          %p116 = pneg %p55
        $region30: #{tpu_custom_call.1} parent=23 // pred_check_branch
          %118 = sbr.rel (%p116) target = $region32
        $region31: #{tpu_custom_call.1} parent=23 // pred_region
          %s120 = ssub.s32 128, 128
          %121 = vsyncadd %s112, %s120
          %s122 = smul.addr %s16, 128
          %s123 = scalar_lea.hbm %s1, %s122
          %s125 = sshll.u32 %s115, 4
          %s126 = int_to_ptr.vmem [resolvable:$true] %s125
          %128 = dma.vmem_to_hbm [thread:$0]  %s126, 128, %s123, %s112
        $region32: #{tpu_custom_call.1} parent=23 // pred_fallthru
          _
      $region24: #{tpu_custom_call.1} parent=5 // pred_fallthru
        _
      %p129 = scmp.le.s32.totalorder 2, %s11
      // Predicated region
      $region33: #{tpu_custom_call.1} parent=5 // pred_check
        %p130 = pneg %p129
      $region34: #{tpu_custom_call.1} parent=5 // pred_check_branch
        %132 = sbr.rel (%p130) target = $region36
      $region35: #{tpu_custom_call.1} parent=5 // pred_region
        %s133 = ssub.s32 %s11, 2
        // Predicated region
        $region37: #{tpu_custom_call.1} parent=35 // pred_check
          %p134 = pneg %p61
        $region38: #{tpu_custom_call.1} parent=35 // pred_check_branch
          %136 = sbr.rel (%p134) target = $region40
        $region39: #{tpu_custom_call.1} parent=35 // pred_region
          %s137 = sand.u32 %s46, 1
          %s138 = scalar_lea.sflag [#allocation4], %s137
          %s139 = sand.u32 %s46, 1
          %s140 = smul.addr %s139, 8
          %s141 = scalar_lea.vmem [#allocation5], %s140
          %142 = dma.done %s138, 128
        $region40: #{tpu_custom_call.1} parent=35 // pred_fallthru
          _
      $region36: #{tpu_custom_call.1} parent=5 // pred_fallthru
        _
    $region6: #{tpu_custom_call.1} parent=1 // loop_footer
      %s15 = sadd.s32 1, %s11
    $region7: #{tpu_custom_call.1} parent=1 // loop_footer_branch
      %10 = sbr.rel target = $region3
    $region8: #{tpu_custom_call.1} parent=1 // loop_exit
      _
    %143 = vsyncpa [#allocation3], 1
    %s144 = scalar_lea.sflag [#allocation3], 1
    %145 = vsyncpa %s144, 1
    %146 = vsyncpa [#allocation4], 1
    %s147 = scalar_lea.sflag [#allocation4], 1
    %148 = vsyncpa %s147, 1

// kernel: actor_forward.1
$region0: #{actor_forward.1}
  #allocation0 [shape = 'u32[]', space=smem, size = 0x4, offset = 0x4, fixed_abs, tag = 'smem constant byte address 0x4 - core index']
  #allocation1 [shape = 'u32[144,128]{1,0:T(1,128)}', space=vmem, size = 0x12000, scoped, tag = 'internal scratch']
  %s0 = inlined_call_operand.vmem [shape: bf16[16,32], index: 0, kind: input, shape index: {}]
  %s1 = inlined_call_operand.hbm [shape: bf16[32,512], index: 1, kind: input, shape index: {}]
  %s2 = inlined_call_operand.vmem [shape: f32[1,512], index: 2, kind: input, shape index: {}]
  %s3 = inlined_call_operand.hbm [shape: bf16[512,384], index: 3, kind: input, shape index: {}]
  %s4 = inlined_call_operand.vmem [shape: f32[1,384], index: 4, kind: input, shape index: {}]
  %s5 = inlined_call_operand.hbm [shape: bf16[384,128], index: 5, kind: input, shape index: {}]
  %s6 = inlined_call_operand.vmem [shape: f32[1,128], index: 6, kind: input, shape index: {}]
  %s7 = inlined_call_operand.vmem [shape: f32[16,128], index: 7, kind: output, shape index: {}]
  %s8 = sld [smem:[#allocation0]]
  $region50: #{actor_forward.1} parent=0
    _
  %s10 = ssub.s32 1, %s8
  %s11 = scalar_select 0, %s10, %s8
  $region1: #{actor_forward.1} parent=0
    #allocation2 [shape = 'u8[32768]{0}', space=vmem, size = 0x8000, scoped, tag = 'input window, operand 1, single buffered']
    #allocation3 [shape = 's32[1]{0}', space=sflag, size = 0x4, scoped, tag = 'scoped memory for actor_forward.1']
    #allocation4 [shape = 'u8[393216]{0}', space=vmem, size = 0x60000, scoped, tag = 'input window, operand 3, single buffered']
    #allocation5 [shape = 's32[1]{0}', space=sflag, size = 0x4, scoped, tag = 'scoped memory for actor_forward.1']
    #allocation6 [shape = 'u8[98304]{0}', space=vmem, size = 0x18000, scoped, tag = 'input window, operand 5, single buffered']
    %12 = vsyncpa [#allocation3], 0
    %13 = vsyncpa [#allocation5], 0
    // Predicated region
    $region2: #{actor_forward.1} parent=1 // pred_check
      _
    $region3: #{actor_forward.1} parent=1 // pred_check_branch
      %15 = sbr.rel (0) target = $region5
    $region4: #{actor_forward.1} parent=1 // pred_region
      _
    $region5: #{actor_forward.1} parent=1 // pred_fallthru
      _
    // Predicated region
    $region6: #{actor_forward.1} parent=1 // pred_check
      _
    $region7: #{actor_forward.1} parent=1 // pred_check_branch
      %17 = sbr.rel (0) target = $region9
    $region8: #{actor_forward.1} parent=1 // pred_region
      %s19 = ssub.s32 1024, 1024
      %20 = vsyncadd [#allocation3], %s19
      %s21 = sshll.u32 [#allocation2], 4
      %s22 = int_to_ptr.vmem [resolvable:$true] %s21
      %27 = dma.hbm_to_vmem [thread:$0]  %s1, 1024, %s22, [#allocation3], 256, 256, 16
    $region9: #{actor_forward.1} parent=1 // pred_fallthru
      _
    // Predicated region
    $region10: #{actor_forward.1} parent=1 // pred_check
      _
    $region11: #{actor_forward.1} parent=1 // pred_check_branch
      %29 = sbr.rel (0) target = $region13
    $region12: #{actor_forward.1} parent=1 // pred_region
      _
    $region13: #{actor_forward.1} parent=1 // pred_fallthru
      _
    // Predicated region
    $region14: #{actor_forward.1} parent=1 // pred_check
      _
    $region15: #{actor_forward.1} parent=1 // pred_check_branch
      %31 = sbr.rel (0) target = $region17
    $region16: #{actor_forward.1} parent=1 // pred_region
      %s33 = ssub.s32 12288, 12288
      %34 = vsyncadd [#allocation5], %s33
      %s35 = sshll.u32 [#allocation4], 4
      %s36 = int_to_ptr.vmem [resolvable:$true] %s35
      %41 = dma.hbm_to_vmem [thread:$0]  %s3, 12288, %s36, [#allocation5], 192, 192, 12
    $region17: #{actor_forward.1} parent=1 // pred_fallthru
      _
    // Predicated region
    $region18: #{actor_forward.1} parent=1 // pred_check
      _
    $region19: #{actor_forward.1} parent=1 // pred_check_branch
      %43 = sbr.rel (0) target = $region21
    $region20: #{actor_forward.1} parent=1 // pred_region
      _
    $region21: #{actor_forward.1} parent=1 // pred_fallthru
      _
    // Predicated region
    $region22: #{actor_forward.1} parent=1 // pred_check
      _
    $region23: #{actor_forward.1} parent=1 // pred_check_branch
      %45 = sbr.rel (0) target = $region25
    $region24: #{actor_forward.1} parent=1 // pred_region
      %s47 = ssub.s32 3072, 3072
      %48 = vsyncadd [#allocation5], %s47
      %s49 = sshll.u32 [#allocation6], 4
      %s50 = int_to_ptr.vmem [resolvable:$true] %s49
      %55 = dma.hbm_to_vmem [thread:$0]  %s5, 3072, %s50, [#allocation5], 64, 64, 4
    $region25: #{actor_forward.1} parent=1 // pred_fallthru
      _
    // Predicated region
    $region26: #{actor_forward.1} parent=1 // pred_check
      _
    $region27: #{actor_forward.1} parent=1 // pred_check_branch
      %57 = sbr.rel (0) target = $region29
    $region28: #{actor_forward.1} parent=1 // pred_region
      _
    $region29: #{actor_forward.1} parent=1 // pred_fallthru
      _
    // Predicated region
    $region30: #{actor_forward.1} parent=1 // pred_check
      _
    $region31: #{actor_forward.1} parent=1 // pred_check_branch
      %59 = sbr.rel (0) target = $region33
    $region32: #{actor_forward.1} parent=1 // pred_region
      %60 = dma.done [#allocation3], 1024
    $region33: #{actor_forward.1} parent=1 // pred_fallthru
      _
    // Predicated region
    $region34: #{actor_forward.1} parent=1 // pred_check
      _
    $region35: #{actor_forward.1} parent=1 // pred_check_branch
      %62 = sbr.rel (0) target = $region37
    $region36: #{actor_forward.1} parent=1 // pred_region
      %63 = dma.done [#allocation5], 12288
    $region37: #{actor_forward.1} parent=1 // pred_fallthru
      _
    // Predicated region
    $region38: #{actor_forward.1} parent=1 // pred_check
      _
    $region39: #{actor_forward.1} parent=1 // pred_check_branch
      %65 = sbr.rel (0) target = $region41
    $region40: #{actor_forward.1} parent=1 // pred_region
      %66 = dma.done [#allocation5], 3072
    $region41: #{actor_forward.1} parent=1 // pred_fallthru
      _
    %v68 = vld [vmem:[%s0] sm:$0xf]
    %v69 = vld [vmem:[%s0 + $0x4] sm:$0xf]
    %v70 = vld [vmem:[#allocation2] sm:$0xff]
    %v71 = vld [vmem:[#allocation2 + $0x8] sm:$0xff]
    %v72 = vld [vmem:[#allocation2 + $0x10] sm:$0xff]
    %v73 = vld [vmem:[#allocation2 + $0x18] sm:$0xff]
    %v74 = vld [vmem:[#allocation2 + $0x20] sm:$0xff]
    %v75 = vld [vmem:[#allocation2 + $0x28] sm:$0xff]
    %v76 = vld [vmem:[#allocation2 + $0x30] sm:$0xff]
    %v77 = vld [vmem:[#allocation2 + $0x38] sm:$0xff]
    %v78 = vld [vmem:[%s2] sm:$0xf]
    %v80 = vlaneseq
    %v81 = vshrl.u32 %v80, 7
    %v82 = vsub.s32 0, %v81
    %v83 = vrot.slane %v78, %v82
    %v84 = vlaneseq
    %v85 = vshrl.u32 %v84, 7
    %v86 = vsub.s32 1, %v85
    %v87 = vrot.slane %v78, %v86
    %v88 = vlaneseq
    %v89 = vshrl.u32 %v88, 7
    %v90 = vsub.s32 2, %v89
    %v91 = vrot.slane %v78, %v90
    %v92 = vlaneseq
    %v93 = vshrl.u32 %v92, 7
    %v94 = vsub.s32 3, %v93
    %v95 = vrot.slane %v78, %v94
    %v102 = vunpack.c.l.b16 %v68
    %v103 = vunpack.c.l.b16 %v69
    %v104 = vpack.c.b16 %v103, %v102
    %v113 = vunpack.c.l.b16 %v70
    %v114 = vunpack.c.h.b16 %v70
    %v115 = vunpack.c.l.b16 %v71
    %v116 = vunpack.c.h.b16 %v71
    %v117 = vunpack.c.l.b16 %v72
    %v118 = vunpack.c.h.b16 %v72
    %v119 = vunpack.c.l.b16 %v73
    %v120 = vunpack.c.h.b16 %v73
    %v121 = vunpack.c.l.b16 %v74
    %v122 = vunpack.c.h.b16 %v74
    %v123 = vunpack.c.l.b16 %v75
    %v124 = vunpack.c.h.b16 %v75
    %v125 = vunpack.c.l.b16 %v76
    %v126 = vunpack.c.h.b16 %v76
    %v127 = vunpack.c.l.b16 %v77
    %v128 = vunpack.c.h.b16 %v77
    %v129 = vpack.c.b16 %v117, %v113
    %v130 = vpack.c.b16 %v118, %v114
    %v131 = vpack.c.b16 %v119, %v115
    %v132 = vpack.c.b16 %v120, %v116
    %v133 = vpack.c.b16 %v125, %v121
    %v134 = vpack.c.b16 %v126, %v122
    %v135 = vpack.c.b16 %v127, %v123
    %v136 = vpack.c.b16 %v128, %v124
    %vm145 = vcmask 261120
    %v147 = vsel %vm145, %v104, 0
    %149 = vmatprep.subr.bf16.mxu0 %v130
    %150 = vmatpush1.bf16.msra.mxu0 %v129
    %151 = vmatprep.subr.bf16.mxu0 %v134
    %152 = vmatpush1.bf16.msra.mxu0 %v133
    %153 = vmatprep.subr.bf16.mxu0 0
    %154 = vmatpush1.bf16.msra.mxu0 0
    %155 = vmatprep.subr.bf16.mxu0 0
    %156 = vmatpush1.bf16.msra.mxu0 0
    %157 = vmatprep.subr.bf16.mxu0 0
    %158 = vmatpush1.bf16.msra.mxu0 0
    %159 = vmatprep.subr.bf16.mxu0 0
    %160 = vmatpush1.bf16.msra.mxu0 0
    %161 = vmatprep.subr.bf16.mxu0 0
    %162 = vmatpush1.bf16.msra.mxu0 0
    %163 = vmatprep.subr.bf16.mxu0 0
    %164 = vmatpush1.bf16.msra.mxu0 0
    %165 = vmatprep.subr.bf16.mxu0 0
    %166 = vmatpush1.bf16.msra.mxu0 0
    %167 = vmatprep.subr.bf16.mxu0 0
    %168 = vmatpush1.bf16.msra.mxu0 0
    %169 = vmatprep.subr.bf16.mxu0 0
    %170 = vmatpush1.bf16.msra.mxu0 0
    %171 = vmatprep.subr.bf16.mxu0 0
    %172 = vmatpush1.bf16.msra.mxu0 0
    %173 = vmatprep.subr.bf16.mxu0 0
    %174 = vmatpush1.bf16.msra.mxu0 0
    %175 = vmatprep.subr.bf16.mxu0 0
    %176 = vmatpush1.bf16.msra.mxu0 0
    %177 = vmatprep.subr.bf16.mxu0 0
    %178 = vmatpush1.bf16.msra.mxu0 0
    %179 = vmatprep.subr.bf16.mxu0 0
    %180 = vmatpush1.bf16.msra.mxu0 0
    %181 = vmatprep.mubr.bf16.mxu0 0
    %182 = vmatmul.mubr.bf16.gmra.mrb[0].mxu0 %v147
    %v183 = vpop.f32.mrb[0].mxu0
    %v184 = vadd.f32 %v83, %v183
    %v185 = vpop.f32.mrb[0].mxu0
    %v186 = vadd.f32 %v87, %v185
    %v187 = vpop.f32.mrb[0].mxu0
    %v188 = vadd.f32 %v83, %v187
    %v189 = vpop.f32.mrb[0].mxu0
    %v190 = vadd.f32 %v87, %v189
    %191 = vdwg.mxu0
    %192 = vmatprep.subr.bf16.mxu0 %v132
    %193 = vmatpush1.bf16.msra.mxu0 %v131
    %194 = vmatprep.subr.bf16.mxu0 %v136
    %195 = vmatpush1.bf16.msra.mxu0 %v135
    %196 = vmatprep.subr.bf16.mxu0 0
    %197 = vmatpush1.bf16.msra.mxu0 0
    %198 = vmatprep.subr.bf16.mxu0 0
    %199 = vmatpush1.bf16.msra.mxu0 0
    %200 = vmatprep.subr.bf16.mxu0 0
    %201 = vmatpush1.bf16.msra.mxu0 0
    %202 = vmatprep.subr.bf16.mxu0 0
    %203 = vmatpush1.bf16.msra.mxu0 0
    %204 = vmatprep.subr.bf16.mxu0 0
    %205 = vmatpush1.bf16.msra.mxu0 0
    %206 = vmatprep.subr.bf16.mxu0 0
    %207 = vmatpush1.bf16.msra.mxu0 0
    %208 = vmatprep.subr.bf16.mxu0 0
    %209 = vmatpush1.bf16.msra.mxu0 0
    %210 = vmatprep.subr.bf16.mxu0 0
    %211 = vmatpush1.bf16.msra.mxu0 0
    %212 = vmatprep.subr.bf16.mxu0 0
    %213 = vmatpush1.bf16.msra.mxu0 0
    %214 = vmatprep.subr.bf16.mxu0 0
    %215 = vmatpush1.bf16.msra.mxu0 0
    %216 = vmatprep.subr.bf16.mxu0 0
    %217 = vmatpush1.bf16.msra.mxu0 0
    %218 = vmatprep.subr.bf16.mxu0 0
    %219 = vmatpush1.bf16.msra.mxu0 0
    %220 = vmatprep.subr.bf16.mxu0 0
    %221 = vmatpush1.bf16.msra.mxu0 0
    %222 = vmatprep.subr.bf16.mxu0 0
    %223 = vmatpush1.bf16.msra.mxu0 0
    %224 = vmatprep.mubr.bf16.mxu0 0
    %225 = vmatmul.mubr.bf16.gmra.mrb[0].mxu0 %v147
    %v226 = vpop.f32.mrb[0].mxu0
    %v227 = vadd.f32 %v91, %v226
    %v228 = vpop.f32.mrb[0].mxu0
    %v229 = vadd.f32 %v95, %v228
    %v230 = vpop.f32.mrb[0].mxu0
    %v231 = vadd.f32 %v91, %v230
    %v232 = vpop.f32.mrb[0].mxu0
    %v233 = vadd.f32 %v95, %v232
    %234 = vdwg.mxu0
    %v235 = vmax.f32 %v184, 0.0
    %v236 = vmax.f32 %v186, 0.0
    %v237 = vmax.f32 %v227, 0.0
    %v238 = vmax.f32 %v229, 0.0
    %v239 = vmax.f32 %v188, 0.0
    %v240 = vmax.f32 %v190, 0.0
    %v241 = vmax.f32 %v231, 0.0
    %v242 = vmax.f32 %v233, 0.0
    %v243 = vpack.c.bf16 %v239, %v235
    %v244 = vpack.c.bf16 %v240, %v236
    %v245 = vpack.c.bf16 %v241, %v237
    %v246 = vpack.c.bf16 %v242, %v238
    %v247 = vld [vmem:[#allocation4] sm:$0xff]
    %v248 = vld [vmem:[#allocation4 + $0x8] sm:$0xf]
    %v249 = vld [vmem:[#allocation4 + $0xc] sm:$0xff]
    %v250 = vld [vmem:[#allocation4 + $0x14] sm:$0xf]
    %v251 = vld [vmem:[#allocation4 + $0x18] sm:$0xff]
    %v252 = vld [vmem:[#allocation4 + $0x20] sm:$0xf]
    %v253 = vld [vmem:[#allocation4 + $0x24] sm:$0xff]
    %v254 = vld [vmem:[#allocation4 + $0x2c] sm:$0xf]
    %v255 = vld [vmem:[#allocation4 + $0x30] sm:$0xff]
    %v256 = vld [vmem:[#allocation4 + $0x38] sm:$0xf]
    %v257 = vld [vmem:[#allocation4 + $0x3c] sm:$0xff]
    %v258 = vld [vmem:[#allocation4 + $0x44] sm:$0xf]
    %v259 = vld [vmem:[#allocation4 + $0x48] sm:$0xff]
    %v260 = vld [vmem:[#allocation4 + $0x50] sm:$0xf]
    %v261 = vld [vmem:[#allocation4 + $0x54] sm:$0xff]
    %v262 = vld [vmem:[#allocation4 + $0x5c] sm:$0xf]
    %v263 = vld [vmem:[#allocation4 + $0x60] sm:$0xff]
    %v264 = vld [vmem:[#allocation4 + $0x68] sm:$0xf]
    %v265 = vld [vmem:[#allocation4 + $0x6c] sm:$0xff]
    %v266 = vld [vmem:[#allocation4 + $0x74] sm:$0xf]
    %v267 = vld [vmem:[#allocation4 + $0x78] sm:$0xff]
    %v268 = vld [vmem:[#allocation4 + $0x80] sm:$0xf]
    %v269 = vld [vmem:[#allocation4 + $0x84] sm:$0xff]
    %v270 = vld [vmem:[#allocation4 + $0x8c] sm:$0xf]
    %v271 = vld [vmem:[#allocation4 + $0x90] sm:$0xff]
    %v272 = vld [vmem:[#allocation4 + $0x98] sm:$0xf]
    %v273 = vld [vmem:[#allocation4 + $0x9c] sm:$0xff]
    %v274 = vld [vmem:[#allocation4 + $0xa4] sm:$0xf]
    %v275 = vld [vmem:[#allocation4 + $0xa8] sm:$0xff]
    %v276 = vld [vmem:[#allocation4 + $0xb0] sm:$0xf]
    %v277 = vld [vmem:[#allocation4 + $0xb4] sm:$0xff]
    %v278 = vld [vmem:[#allocation4 + $0xbc] sm:$0xf]
    %v279 = vld [vmem:[#allocation4 + $0xc0] sm:$0xff]
    %v280 = vld [vmem:[#allocation4 + $0xc8] sm:$0xf]
    %v281 = vld [vmem:[#allocation4 + $0xcc] sm:$0xff]
    %v282 = vld [vmem:[#allocation4 + $0xd4] sm:$0xf]
    %v283 = vld [vmem:[#allocation4 + $0xd8] sm:$0xff]
    %v284 = vld [vmem:[#allocation4 + $0xe0] sm:$0xf]
    %v285 = vld [vmem:[#allocation4 + $0xe4] sm:$0xff]
    %v286 = vld [vmem:[#allocation4 + $0xec] sm:$0xf]
    %v287 = vld [vmem:[#allocation4 + $0xf0] sm:$0xff]
    %v288 = vld [vmem:[#allocation4 + $0xf8] sm:$0xf]
    %v289 = vld [vmem:[#allocation4 + $0xfc] sm:$0xff]
    %v290 = vld [vmem:[#allocation4 + $0x104] sm:$0xf]
    %v291 = vld [vmem:[#allocation4 + $0x108] sm:$0xff]
    %v292 = vld [vmem:[#allocation4 + $0x110] sm:$0xf]
    %v293 = vld [vmem:[#allocation4 + $0x114] sm:$0xff]
    %v294 = vld [vmem:[#allocation4 + $0x11c] sm:$0xf]
    %v295 = vld [vmem:[#allocation4 + $0x120] sm:$0xff]
    %v296 = vld [vmem:[#allocation4 + $0x128] sm:$0xf]
    %v297 = vld [vmem:[#allocation4 + $0x12c] sm:$0xff]
    %v298 = vld [vmem:[#allocation4 + $0x134] sm:$0xf]
    %v299 = vld [vmem:[#allocation4 + $0x138] sm:$0xff]
    %v300 = vld [vmem:[#allocation4 + $0x140] sm:$0xf]
    %v301 = vld [vmem:[#allocation4 + $0x144] sm:$0xff]
    %v302 = vld [vmem:[#allocation4 + $0x14c] sm:$0xf]
    %v303 = vld [vmem:[#allocation4 + $0x150] sm:$0xff]
    %v304 = vld [vmem:[#allocation4 + $0x158] sm:$0xf]
    %v305 = vld [vmem:[#allocation4 + $0x15c] sm:$0xff]
    %v306 = vld [vmem:[#allocation4 + $0x164] sm:$0xf]
    %v307 = vld [vmem:[#allocation4 + $0x168] sm:$0xff]
    %v308 = vld [vmem:[#allocation4 + $0x170] sm:$0xf]
    %v309 = vld [vmem:[#allocation4 + $0x174] sm:$0xff]
    %v310 = vld [vmem:[#allocation4 + $0x17c] sm:$0xf]
    %v311 = vld [vmem:[#allocation4 + $0x180] sm:$0xff]
    %v312 = vld [vmem:[#allocation4 + $0x188] sm:$0xf]
    %v313 = vld [vmem:[#allocation4 + $0x18c] sm:$0xff]
    %v314 = vld [vmem:[#allocation4 + $0x194] sm:$0xf]
    %v315 = vld [vmem:[#allocation4 + $0x198] sm:$0xff]
    %v316 = vld [vmem:[#allocation4 + $0x1a0] sm:$0xf]
    %v317 = vld [vmem:[#allocation4 + $0x1a4] sm:$0xff]
    %v318 = vld [vmem:[#allocation4 + $0x1ac] sm:$0xf]
    %v319 = vld [vmem:[#allocation4 + $0x1b0] sm:$0xff]
    %v320 = vld [vmem:[#allocation4 + $0x1b8] sm:$0xf]
    %v321 = vld [vmem:[#allocation4 + $0x1bc] sm:$0xff]
    %v322 = vld [vmem:[#allocation4 + $0x1c4] sm:$0xf]
    %v323 = vld [vmem:[#allocation4 + $0x1c8] sm:$0xff]
    %v324 = vld [vmem:[#allocation4 + $0x1d0] sm:$0xf]
    %v325 = vld [vmem:[#allocation4 + $0x1d4] sm:$0xff]
    %v326 = vld [vmem:[#allocation4 + $0x1dc] sm:$0xf]
    %v327 = vld [vmem:[#allocation4 + $0x1e0] sm:$0xff]
    %v328 = vld [vmem:[#allocation4 + $0x1e8] sm:$0xf]
    %v329 = vld [vmem:[#allocation4 + $0x1ec] sm:$0xff]
    %v330 = vld [vmem:[#allocation4 + $0x1f4] sm:$0xf]
    %v331 = vld [vmem:[#allocation4 + $0x1f8] sm:$0xff]
    %v332 = vld [vmem:[#allocation4 + $0x200] sm:$0xf]
    %v333 = vld [vmem:[#allocation4 + $0x204] sm:$0xff]
    %v334 = vld [vmem:[#allocation4 + $0x20c] sm:$0xf]
    %v335 = vld [vmem:[#allocation4 + $0x210] sm:$0xff]
    %v336 = vld [vmem:[#allocation4 + $0x218] sm:$0xf]
    %v337 = vld [vmem:[#allocation4 + $0x21c] sm:$0xff]
    %v338 = vld [vmem:[#allocation4 + $0x224] sm:$0xf]
    %v339 = vld [vmem:[#allocation4 + $0x228] sm:$0xff]
    %v340 = vld [vmem:[#allocation4 + $0x230] sm:$0xf]
    %v341 = vld [vmem:[#allocation4 + $0x234] sm:$0xff]
    %v342 = vld [vmem:[#allocation4 + $0x23c] sm:$0xf]
    %v343 = vld [vmem:[#allocation4 + $0x240] sm:$0xff]
    %v344 = vld [vmem:[#allocation4 + $0x248] sm:$0xf]
    %v345 = vld [vmem:[#allocation4 + $0x24c] sm:$0xff]
    %v346 = vld [vmem:[#allocation4 + $0x254] sm:$0xf]
    %v347 = vld [vmem:[#allocation4 + $0x258] sm:$0xff]
    %v348 = vld [vmem:[#allocation4 + $0x260] sm:$0xf]
    %v349 = vld [vmem:[#allocation4 + $0x264] sm:$0xff]
    %v350 = vld [vmem:[#allocation4 + $0x26c] sm:$0xf]
    %v351 = vld [vmem:[#allocation4 + $0x270] sm:$0xff]
    %v352 = vld [vmem:[#allocation4 + $0x278] sm:$0xf]
    %v353 = vld [vmem:[#allocation4 + $0x27c] sm:$0xff]
    %v354 = vld [vmem:[#allocation4 + $0x284] sm:$0xf]
    %v355 = vld [vmem:[#allocation4 + $0x288] sm:$0xff]
    %v356 = vld [vmem:[#allocation4 + $0x290] sm:$0xf]
    %v357 = vld [vmem:[#allocation4 + $0x294] sm:$0xff]
    %v358 = vld [vmem:[#allocation4 + $0x29c] sm:$0xf]
    %v359 = vld [vmem:[#allocation4 + $0x2a0] sm:$0xff]
    %v360 = vld [vmem:[#allocation4 + $0x2a8] sm:$0xf]
    %v361 = vld [vmem:[#allocation4 + $0x2ac] sm:$0xff]
    %v362 = vld [vmem:[#allocation4 + $0x2b4] sm:$0xf]
    %v363 = vld [vmem:[#allocation4 + $0x2b8] sm:$0xff]
    %v364 = vld [vmem:[#allocation4 + $0x2c0] sm:$0xf]
    %v365 = vld [vmem:[#allocation4 + $0x2c4] sm:$0xff]
    %v366 = vld [vmem:[#allocation4 + $0x2cc] sm:$0xf]
    %v367 = vld [vmem:[#allocation4 + $0x2d0] sm:$0xff]
    %v368 = vld [vmem:[#allocation4 + $0x2d8] sm:$0xf]
    %v369 = vld [vmem:[#allocation4 + $0x2dc] sm:$0xff]
    %v370 = vld [vmem:[#allocation4 + $0x2e4] sm:$0xf]
    %v371 = vld [vmem:[#allocation4 + $0x2e8] sm:$0xff]
    %v372 = vld [vmem:[#allocation4 + $0x2f0] sm:$0xf]
    %v373 = vld [vmem:[#allocation4 + $0x2f4] sm:$0xff]
    %v374 = vld [vmem:[#allocation4 + $0x2fc] sm:$0xf]
    %v375 = vld [vmem:[%s4] sm:$0x7]
    %v377 = vlaneseq
    %v378 = vshrl.u32 %v377, 7
    %v379 = vsub.s32 0, %v378
    %v380 = vrot.slane %v375, %v379
    %v381 = vlaneseq
    %v382 = vshrl.u32 %v381, 7
    %v383 = vsub.s32 1, %v382
    %v384 = vrot.slane %v375, %v383
    %v385 = vlaneseq
    %v386 = vshrl.u32 %v385, 7
    %v387 = vsub.s32 2, %v386
    %v388 = vrot.slane %v375, %v387
    %v520 = vunpack.c.l.b16 %v247
    %v521 = vunpack.c.h.b16 %v247
    %v522 = vunpack.c.l.b16 %v248
    %v523 = vunpack.c.l.b16 %v249
    %v524 = vunpack.c.h.b16 %v249
    %v525 = vunpack.c.l.b16 %v250
    %v526 = vunpack.c.l.b16 %v251
    %v527 = vunpack.c.h.b16 %v251
    %v528 = vunpack.c.l.b16 %v252
    %v529 = vunpack.c.l.b16 %v253
    %v530 = vunpack.c.h.b16 %v253
    %v531 = vunpack.c.l.b16 %v254
    %v532 = vunpack.c.l.b16 %v255
    %v533 = vunpack.c.h.b16 %v255
    %v534 = vunpack.c.l.b16 %v256
    %v535 = vunpack.c.l.b16 %v257
    %v536 = vunpack.c.h.b16 %v257
    %v537 = vunpack.c.l.b16 %v258
    %v538 = vunpack.c.l.b16 %v259
    %v539 = vunpack.c.h.b16 %v259
    %v540 = vunpack.c.l.b16 %v260
    %v541 = vunpack.c.l.b16 %v261
    %v542 = vunpack.c.h.b16 %v261
    %v543 = vunpack.c.l.b16 %v262
    %v544 = vunpack.c.l.b16 %v263
    %v545 = vunpack.c.h.b16 %v263
    %v546 = vunpack.c.l.b16 %v264
    %v547 = vunpack.c.l.b16 %v265
    %v548 = vunpack.c.h.b16 %v265
    %v549 = vunpack.c.l.b16 %v266
    %v550 = vunpack.c.l.b16 %v267
    %v551 = vunpack.c.h.b16 %v267
    %v552 = vunpack.c.l.b16 %v268
    %v553 = vunpack.c.l.b16 %v269
    %v554 = vunpack.c.h.b16 %v269
    %v555 = vunpack.c.l.b16 %v270
    %v556 = vunpack.c.l.b16 %v271
    %v557 = vunpack.c.h.b16 %v271
    %v558 = vunpack.c.l.b16 %v272
    %v559 = vunpack.c.l.b16 %v273
    %v560 = vunpack.c.h.b16 %v273
    %v561 = vunpack.c.l.b16 %v274
    %v562 = vunpack.c.l.b16 %v275
    %v563 = vunpack.c.h.b16 %v275
    %v564 = vunpack.c.l.b16 %v276
    %v565 = vunpack.c.l.b16 %v277
    %v566 = vunpack.c.h.b16 %v277
    %v567 = vunpack.c.l.b16 %v278
    %v568 = vunpack.c.l.b16 %v279
    %v569 = vunpack.c.h.b16 %v279
    %v570 = vunpack.c.l.b16 %v280
    %v571 = vunpack.c.l.b16 %v281
    %v572 = vunpack.c.h.b16 %v281
    %v573 = vunpack.c.l.b16 %v282
    %v574 = vunpack.c.l.b16 %v283
    %v575 = vunpack.c.h.b16 %v283
    %v576 = vunpack.c.l.b16 %v284
    %v577 = vunpack.c.l.b16 %v285
    %v578 = vunpack.c.h.b16 %v285
    %v579 = vunpack.c.l.b16 %v286
    %v580 = vunpack.c.l.b16 %v287
    %v581 = vunpack.c.h.b16 %v287
    %v582 = vunpack.c.l.b16 %v288
    %v583 = vunpack.c.l.b16 %v289
    %v584 = vunpack.c.h.b16 %v289
    %v585 = vunpack.c.l.b16 %v290
    %v586 = vunpack.c.l.b16 %v291
    %v587 = vunpack.c.h.b16 %v291
    %v588 = vunpack.c.l.b16 %v292
    %v589 = vunpack.c.l.b16 %v293
    %v590 = vunpack.c.h.b16 %v293
    %v591 = vunpack.c.l.b16 %v294
    %v592 = vunpack.c.l.b16 %v295
    %v593 = vunpack.c.h.b16 %v295
    %v594 = vunpack.c.l.b16 %v296
    %v595 = vunpack.c.l.b16 %v297
    %v596 = vunpack.c.h.b16 %v297
    %v597 = vunpack.c.l.b16 %v298
    %v598 = vunpack.c.l.b16 %v299
    %v599 = vunpack.c.h.b16 %v299
    %v600 = vunpack.c.l.b16 %v300
    %v601 = vunpack.c.l.b16 %v301
    %v602 = vunpack.c.h.b16 %v301
    %v603 = vunpack.c.l.b16 %v302
    %v604 = vunpack.c.l.b16 %v303
    %v605 = vunpack.c.h.b16 %v303
    %v606 = vunpack.c.l.b16 %v304
    %v607 = vunpack.c.l.b16 %v305
    %v608 = vunpack.c.h.b16 %v305
    %v609 = vunpack.c.l.b16 %v306
    %v610 = vunpack.c.l.b16 %v307
    %v611 = vunpack.c.h.b16 %v307
    %v612 = vunpack.c.l.b16 %v308
    %v613 = vunpack.c.l.b16 %v309
    %v614 = vunpack.c.h.b16 %v309
    %v615 = vunpack.c.l.b16 %v310
    %v616 = vunpack.c.l.b16 %v311
    %v617 = vunpack.c.h.b16 %v311
    %v618 = vunpack.c.l.b16 %v312
    %v619 = vunpack.c.l.b16 %v313
    %v620 = vunpack.c.h.b16 %v313
    %v621 = vunpack.c.l.b16 %v314
    %v622 = vunpack.c.l.b16 %v315
    %v623 = vunpack.c.h.b16 %v315
    %v624 = vunpack.c.l.b16 %v316
    %v625 = vunpack.c.l.b16 %v317
    %v626 = vunpack.c.h.b16 %v317
    %v627 = vunpack.c.l.b16 %v318
    %v628 = vunpack.c.l.b16 %v319
    %v629 = vunpack.c.h.b16 %v319
    %v630 = vunpack.c.l.b16 %v320
    %v631 = vunpack.c.l.b16 %v321
    %v632 = vunpack.c.h.b16 %v321
    %v633 = vunpack.c.l.b16 %v322
    %v634 = vunpack.c.l.b16 %v323
    %v635 = vunpack.c.h.b16 %v323
    %v636 = vunpack.c.l.b16 %v324
    %v637 = vunpack.c.l.b16 %v325
    %v638 = vunpack.c.h.b16 %v325
    %v639 = vunpack.c.l.b16 %v326
    %v640 = vunpack.c.l.b16 %v327
    %v641 = vunpack.c.h.b16 %v327
    %v642 = vunpack.c.l.b16 %v328
    %v643 = vunpack.c.l.b16 %v329
    %v644 = vunpack.c.h.b16 %v329
    %v645 = vunpack.c.l.b16 %v330
    %v646 = vunpack.c.l.b16 %v331
    %v647 = vunpack.c.h.b16 %v331
    %v648 = vunpack.c.l.b16 %v332
    %v649 = vunpack.c.l.b16 %v333
    %v650 = vunpack.c.h.b16 %v333
    %v651 = vunpack.c.l.b16 %v334
    %v652 = vunpack.c.l.b16 %v335
    %v653 = vunpack.c.h.b16 %v335
    %v654 = vunpack.c.l.b16 %v336
    %v655 = vunpack.c.l.b16 %v337
    %v656 = vunpack.c.h.b16 %v337
    %v657 = vunpack.c.l.b16 %v338
    %v658 = vunpack.c.l.b16 %v339
    %v659 = vunpack.c.h.b16 %v339
    %v660 = vunpack.c.l.b16 %v340
    %v661 = vunpack.c.l.b16 %v341
    %v662 = vunpack.c.h.b16 %v341
    %v663 = vunpack.c.l.b16 %v342
    %v664 = vunpack.c.l.b16 %v343
    %v665 = vunpack.c.h.b16 %v343
    %v666 = vunpack.c.l.b16 %v344
    %v667 = vunpack.c.l.b16 %v345
    %v668 = vunpack.c.h.b16 %v345
    %v669 = vunpack.c.l.b16 %v346
    %v670 = vunpack.c.l.b16 %v347
    %v671 = vunpack.c.h.b16 %v347
    %v672 = vunpack.c.l.b16 %v348
    %v673 = vunpack.c.l.b16 %v349
    %v674 = vunpack.c.h.b16 %v349
    %v675 = vunpack.c.l.b16 %v350
    %v676 = vunpack.c.l.b16 %v351
    %v677 = vunpack.c.h.b16 %v351
    %v678 = vunpack.c.l.b16 %v352
    %v679 = vunpack.c.l.b16 %v353
    %v680 = vunpack.c.h.b16 %v353
    %v681 = vunpack.c.l.b16 %v354
    %v682 = vunpack.c.l.b16 %v355
    %v683 = vunpack.c.h.b16 %v355
    %v684 = vunpack.c.l.b16 %v356
    %v685 = vunpack.c.l.b16 %v357
    %v686 = vunpack.c.h.b16 %v357
    %v687 = vunpack.c.l.b16 %v358
    %v688 = vunpack.c.l.b16 %v359
    %v689 = vunpack.c.h.b16 %v359
    %v690 = vunpack.c.l.b16 %v360
    %v691 = vunpack.c.l.b16 %v361
    %v692 = vunpack.c.h.b16 %v361
    %v693 = vunpack.c.l.b16 %v362
    %v694 = vunpack.c.l.b16 %v363
    %v695 = vunpack.c.h.b16 %v363
    %v696 = vunpack.c.l.b16 %v364
    %v697 = vunpack.c.l.b16 %v365
    %v698 = vunpack.c.h.b16 %v365
    %v699 = vunpack.c.l.b16 %v366
    %v700 = vunpack.c.l.b16 %v367
    %v701 = vunpack.c.h.b16 %v367
    %v702 = vunpack.c.l.b16 %v368
    %v703 = vunpack.c.l.b16 %v369
    %v704 = vunpack.c.h.b16 %v369
    %v705 = vunpack.c.l.b16 %v370
    %v706 = vunpack.c.l.b16 %v371
    %v707 = vunpack.c.h.b16 %v371
    %v708 = vunpack.c.l.b16 %v372
    %v709 = vunpack.c.l.b16 %v373
    %v710 = vunpack.c.h.b16 %v373
    %v711 = vunpack.c.l.b16 %v374
    %v712 = vpack.c.b16 %v523, %v520
    %v713 = vpack.c.b16 %v524, %v521
    %v714 = vpack.c.b16 %v525, %v522
    %v715 = vpack.c.b16 %v529, %v526
    %v716 = vpack.c.b16 %v530, %v527
    %v717 = vpack.c.b16 %v531, %v528
    %v718 = vpack.c.b16 %v535, %v532
    %v719 = vpack.c.b16 %v536, %v533
    %v720 = vpack.c.b16 %v537, %v534
    %v721 = vpack.c.b16 %v541, %v538
    %v722 = vpack.c.b16 %v542, %v539
    %v723 = vpack.c.b16 %v543, %v540
    %v724 = vpack.c.b16 %v547, %v544
    %v725 = vpack.c.b16 %v548, %v545
    %v726 = vpack.c.b16 %v549, %v546
    %v727 = vpack.c.b16 %v553, %v550
    %v728 = vpack.c.b16 %v554, %v551
    %v729 = vpack.c.b16 %v555, %v552
    %v730 = vpack.c.b16 %v559, %v556
    %v731 = vpack.c.b16 %v560, %v557
    %v732 = vpack.c.b16 %v561, %v558
    %v733 = vpack.c.b16 %v565, %v562
    %v734 = vpack.c.b16 %v566, %v563
    %v735 = vpack.c.b16 %v567, %v564
    %v736 = vpack.c.b16 %v571, %v568
    %v737 = vpack.c.b16 %v572, %v569
    %v738 = vpack.c.b16 %v573, %v570
    %v739 = vpack.c.b16 %v577, %v574
    %v740 = vpack.c.b16 %v578, %v575
    %v741 = vpack.c.b16 %v579, %v576
    %v742 = vpack.c.b16 %v583, %v580
    %v743 = vpack.c.b16 %v584, %v581
    %v744 = vpack.c.b16 %v585, %v582
    %v745 = vpack.c.b16 %v589, %v586
    %v746 = vpack.c.b16 %v590, %v587
    %v747 = vpack.c.b16 %v591, %v588
    %v748 = vpack.c.b16 %v595, %v592
    %v749 = vpack.c.b16 %v596, %v593
    %v750 = vpack.c.b16 %v597, %v594
    %v751 = vpack.c.b16 %v601, %v598
    %v752 = vpack.c.b16 %v602, %v599
    %v753 = vpack.c.b16 %v603, %v600
    %v754 = vpack.c.b16 %v607, %v604
    %v755 = vpack.c.b16 %v608, %v605
    %v756 = vpack.c.b16 %v609, %v606
    %v757 = vpack.c.b16 %v613, %v610
    %v758 = vpack.c.b16 %v614, %v611
    %v759 = vpack.c.b16 %v615, %v612
    %v760 = vpack.c.b16 %v619, %v616
    %v761 = vpack.c.b16 %v620, %v617
    %v762 = vpack.c.b16 %v621, %v618
    %v763 = vpack.c.b16 %v625, %v622
    %v764 = vpack.c.b16 %v626, %v623
    %v765 = vpack.c.b16 %v627, %v624
    %v766 = vpack.c.b16 %v631, %v628
    %v767 = vpack.c.b16 %v632, %v629
    %v768 = vpack.c.b16 %v633, %v630
    %v769 = vpack.c.b16 %v637, %v634
    %v770 = vpack.c.b16 %v638, %v635
    %v771 = vpack.c.b16 %v639, %v636
    %v772 = vpack.c.b16 %v643, %v640
    %v773 = vpack.c.b16 %v644, %v641
    %v774 = vpack.c.b16 %v645, %v642
    %v775 = vpack.c.b16 %v649, %v646
    %v776 = vpack.c.b16 %v650, %v647
    %v777 = vpack.c.b16 %v651, %v648
    %v778 = vpack.c.b16 %v655, %v652
    %v779 = vpack.c.b16 %v656, %v653
    %v780 = vpack.c.b16 %v657, %v654
    %v781 = vpack.c.b16 %v661, %v658
    %v782 = vpack.c.b16 %v662, %v659
    %v783 = vpack.c.b16 %v663, %v660
    %v784 = vpack.c.b16 %v667, %v664
    %v785 = vpack.c.b16 %v668, %v665
    %v786 = vpack.c.b16 %v669, %v666
    %v787 = vpack.c.b16 %v673, %v670
    %v788 = vpack.c.b16 %v674, %v671
    %v789 = vpack.c.b16 %v675, %v672
    %v790 = vpack.c.b16 %v679, %v676
    %v791 = vpack.c.b16 %v680, %v677
    %v792 = vpack.c.b16 %v681, %v678
    %v793 = vpack.c.b16 %v685, %v682
    %v794 = vpack.c.b16 %v686, %v683
    %v795 = vpack.c.b16 %v687, %v684
    %v796 = vpack.c.b16 %v691, %v688
    %v797 = vpack.c.b16 %v692, %v689
    %v798 = vpack.c.b16 %v693, %v690
    %v799 = vpack.c.b16 %v697, %v694
    %v800 = vpack.c.b16 %v698, %v695
    %v801 = vpack.c.b16 %v699, %v696
    %v802 = vpack.c.b16 %v703, %v700
    %v803 = vpack.c.b16 %v704, %v701
    %v804 = vpack.c.b16 %v705, %v702
    %v805 = vpack.c.b16 %v709, %v706
    %v806 = vpack.c.b16 %v710, %v707
    %v807 = vpack.c.b16 %v711, %v708
    %904 = vmatprep.subr.bf16.mxu0 %v713
    %905 = vmatpush1.bf16.msra.mxu0 %v712
    %906 = vmatprep.subr.bf16.mxu0 %v716
    %907 = vmatpush1.bf16.msra.mxu0 %v715
    %908 = vmatprep.subr.bf16.mxu0 %v719
    %909 = vmatpush1.bf16.msra.mxu0 %v718
    %910 = vmatprep.subr.bf16.mxu0 %v722
    %911 = vmatpush1.bf16.msra.mxu0 %v721
    %912 = vmatprep.subr.bf16.mxu0 %v725
    %913 = vmatpush1.bf16.msra.mxu0 %v724
    %914 = vmatprep.subr.bf16.mxu0 %v728
    %915 = vmatpush1.bf16.msra.mxu0 %v727
    %916 = vmatprep.subr.bf16.mxu0 %v731
    %917 = vmatpush1.bf16.msra.mxu0 %v730
    %918 = vmatprep.subr.bf16.mxu0 %v734
    %919 = vmatpush1.bf16.msra.mxu0 %v733
    %920 = vmatprep.subr.bf16.mxu0 %v737
    %921 = vmatpush1.bf16.msra.mxu0 %v736
    %922 = vmatprep.subr.bf16.mxu0 %v740
    %923 = vmatpush1.bf16.msra.mxu0 %v739
    %924 = vmatprep.subr.bf16.mxu0 %v743
    %925 = vmatpush1.bf16.msra.mxu0 %v742
    %926 = vmatprep.subr.bf16.mxu0 %v746
    %927 = vmatpush1.bf16.msra.mxu0 %v745
    %928 = vmatprep.subr.bf16.mxu0 %v749
    %929 = vmatpush1.bf16.msra.mxu0 %v748
    %930 = vmatprep.subr.bf16.mxu0 %v752
    %931 = vmatpush1.bf16.msra.mxu0 %v751
    %932 = vmatprep.subr.bf16.mxu0 %v755
    %933 = vmatpush1.bf16.msra.mxu0 %v754
    %934 = vmatprep.subr.bf16.mxu0 %v758
    %935 = vmatpush1.bf16.msra.mxu0 %v757
    %936 = vmatprep.mubr.bf16.mxu0 %v244
    %937 = vmatmul.mubr.bf16.gmra.mrb[0].mxu0 %v243
    %v938 = vpop.f32.mrb[0].mxu0
    %v939 = vadd.f32 %v380, %v938
    %v940 = vpop.f32.mrb[0].mxu0
    %v941 = vadd.f32 %v384, %v940
    %v942 = vpop.f32.mrb[0].mxu0
    %v943 = vadd.f32 %v380, %v942
    %v944 = vpop.f32.mrb[0].mxu0
    %v945 = vadd.f32 %v384, %v944
    %946 = vdwg.mxu0
    %947 = vmatprep.subr.bf16.mxu0 %v761
    %948 = vmatpush1.bf16.msra.mxu0 %v760
    %949 = vmatprep.subr.bf16.mxu0 %v764
    %950 = vmatpush1.bf16.msra.mxu0 %v763
    %951 = vmatprep.subr.bf16.mxu0 %v767
    %952 = vmatpush1.bf16.msra.mxu0 %v766
    %953 = vmatprep.subr.bf16.mxu0 %v770
    %954 = vmatpush1.bf16.msra.mxu0 %v769
    %955 = vmatprep.subr.bf16.mxu0 %v773
    %956 = vmatpush1.bf16.msra.mxu0 %v772
    %957 = vmatprep.subr.bf16.mxu0 %v776
    %958 = vmatpush1.bf16.msra.mxu0 %v775
    %959 = vmatprep.subr.bf16.mxu0 %v779
    %960 = vmatpush1.bf16.msra.mxu0 %v778
    %961 = vmatprep.subr.bf16.mxu0 %v782
    %962 = vmatpush1.bf16.msra.mxu0 %v781
    %963 = vmatprep.subr.bf16.mxu0 %v785
    %964 = vmatpush1.bf16.msra.mxu0 %v784
    %965 = vmatprep.subr.bf16.mxu0 %v788
    %966 = vmatpush1.bf16.msra.mxu0 %v787
    %967 = vmatprep.subr.bf16.mxu0 %v791
    %968 = vmatpush1.bf16.msra.mxu0 %v790
    %969 = vmatprep.subr.bf16.mxu0 %v794
    %970 = vmatpush1.bf16.msra.mxu0 %v793
    %971 = vmatprep.subr.bf16.mxu0 %v797
    %972 = vmatpush1.bf16.msra.mxu0 %v796
    %973 = vmatprep.subr.bf16.mxu0 %v800
    %974 = vmatpush1.bf16.msra.mxu0 %v799
    %975 = vmatprep.subr.bf16.mxu0 %v803
    %976 = vmatpush1.bf16.msra.mxu0 %v802
    %977 = vmatprep.subr.bf16.mxu0 %v806
    %978 = vmatpush1.bf16.msra.mxu0 %v805
    %979 = vmatprep.mubr.bf16.mxu0 %v246
    %980 = vmatmul.mubr.bf16.gmra.mrb[0].mxu0 %v245
    %v981 = vpop.f32.mrb[0].mxu0
    %v982 = vadd.f32 %v939, %v981
    %v983 = vpop.f32.mrb[0].mxu0
    %v984 = vadd.f32 %v941, %v983
    %v985 = vpop.f32.mrb[0].mxu0
    %v986 = vadd.f32 %v943, %v985
    %v987 = vpop.f32.mrb[0].mxu0
    %v988 = vadd.f32 %v945, %v987
    %989 = vdwg.mxu0
    %990 = vmatprep.subr.bf16.mxu0 0
    %991 = vmatpush1.bf16.msra.mxu0 %v714
    %992 = vmatprep.subr.bf16.mxu0 0
    %993 = vmatpush1.bf16.msra.mxu0 %v717
    %994 = vmatprep.subr.bf16.mxu0 0
    %995 = vmatpush1.bf16.msra.mxu0 %v720
    %996 = vmatprep.subr.bf16.mxu0 0
    %997 = vmatpush1.bf16.msra.mxu0 %v723
    %998 = vmatprep.subr.bf16.mxu0 0
    %999 = vmatpush1.bf16.msra.mxu0 %v726
    %1000 = vmatprep.subr.bf16.mxu0 0
    %1001 = vmatpush1.bf16.msra.mxu0 %v729
    %1002 = vmatprep.subr.bf16.mxu0 0
    %1003 = vmatpush1.bf16.msra.mxu0 %v732
    %1004 = vmatprep.subr.bf16.mxu0 0
    %1005 = vmatpush1.bf16.msra.mxu0 %v735
    %1006 = vmatprep.subr.bf16.mxu0 0
    %1007 = vmatpush1.bf16.msra.mxu0 %v738
    %1008 = vmatprep.subr.bf16.mxu0 0
    %1009 = vmatpush1.bf16.msra.mxu0 %v741
    %1010 = vmatprep.subr.bf16.mxu0 0
    %1011 = vmatpush1.bf16.msra.mxu0 %v744
    %1012 = vmatprep.subr.bf16.mxu0 0
    %1013 = vmatpush1.bf16.msra.mxu0 %v747
    %1014 = vmatprep.subr.bf16.mxu0 0
    %1015 = vmatpush1.bf16.msra.mxu0 %v750
    %1016 = vmatprep.subr.bf16.mxu0 0
    %1017 = vmatpush1.bf16.msra.mxu0 %v753
    %1018 = vmatprep.subr.bf16.mxu0 0
    %1019 = vmatpush1.bf16.msra.mxu0 %v756
    %1020 = vmatprep.subr.bf16.mxu0 0
    %1021 = vmatpush1.bf16.msra.mxu0 %v759
    %1022 = vmatprep.mubr.bf16.mxu0 %v244
    %1023 = vmatmul.mubr.bf16.gmra.mrb[0].mxu0 %v243
    %v1024 = vpop.f32.mrb[0].mxu0
    %v1025 = vadd.f32 %v388, %v1024
    %v1026 = vpop.f32.mrb[0].mxu0
    %v1027 = vpop.f32.mrb[0].mxu0
    %v1028 = vadd.f32 %v388, %v1027
    %v1029 = vpop.f32.mrb[0].mxu0
    %1030 = vdwg.mxu0
    %1031 = vmatprep.subr.bf16.mxu0 0
    %1032 = vmatpush1.bf16.msra.mxu0 %v762
    %1033 = vmatprep.subr.bf16.mxu0 0
    %1034 = vmatpush1.bf16.msra.mxu0 %v765
    %1035 = vmatprep.subr.bf16.mxu0 0
    %1036 = vmatpush1.bf16.msra.mxu0 %v768
    %1037 = vmatprep.subr.bf16.mxu0 0
    %1038 = vmatpush1.bf16.msra.mxu0 %v771
    %1039 = vmatprep.subr.bf16.mxu0 0
    %1040 = vmatpush1.bf16.msra.mxu0 %v774
    %1041 = vmatprep.subr.bf16.mxu0 0
    %1042 = vmatpush1.bf16.msra.mxu0 %v777
    %1043 = vmatprep.subr.bf16.mxu0 0
    %1044 = vmatpush1.bf16.msra.mxu0 %v780
    %1045 = vmatprep.subr.bf16.mxu0 0
    %1046 = vmatpush1.bf16.msra.mxu0 %v783
    %1047 = vmatprep.subr.bf16.mxu0 0
    %1048 = vmatpush1.bf16.msra.mxu0 %v786
    %1049 = vmatprep.subr.bf16.mxu0 0
    %1050 = vmatpush1.bf16.msra.mxu0 %v789
    %1051 = vmatprep.subr.bf16.mxu0 0
    %1052 = vmatpush1.bf16.msra.mxu0 %v792
    %1053 = vmatprep.subr.bf16.mxu0 0
    %1054 = vmatpush1.bf16.msra.mxu0 %v795
    %1055 = vmatprep.subr.bf16.mxu0 0
    %1056 = vmatpush1.bf16.msra.mxu0 %v798
    %1057 = vmatprep.subr.bf16.mxu0 0
    %1058 = vmatpush1.bf16.msra.mxu0 %v801
    %1059 = vmatprep.subr.bf16.mxu0 0
    %1060 = vmatpush1.bf16.msra.mxu0 %v804
    %1061 = vmatprep.subr.bf16.mxu0 0
    %1062 = vmatpush1.bf16.msra.mxu0 %v807
    %1063 = vmatprep.mubr.bf16.mxu0 %v246
    %1064 = vmatmul.mubr.bf16.gmra.mrb[0].mxu0 %v245
    %v1065 = vpop.f32.mrb[0].mxu0
    %v1066 = vadd.f32 %v1025, %v1065
    %v1067 = vpop.f32.mrb[0].mxu0
    %v1068 = vpop.f32.mrb[0].mxu0
    %v1069 = vadd.f32 %v1028, %v1068
    %v1070 = vpop.f32.mrb[0].mxu0
    %1071 = vdwg.mxu0
    %v1072 = vmax.f32 %v982, 0.0
    %v1073 = vmax.f32 %v984, 0.0
    %v1074 = vmax.f32 %v1066, 0.0
    %v1075 = vmax.f32 %v986, 0.0
    %v1076 = vmax.f32 %v988, 0.0
    %v1077 = vmax.f32 %v1069, 0.0
    %v1078 = vpack.c.bf16 %v1075, %v1072
    %v1079 = vpack.c.bf16 %v1076, %v1073
    %v1080 = vpack.c.bf16 %v1077, %v1074
    %v1081 = vld [vmem:[#allocation6] sm:$0xf]
    %v1082 = vld [vmem:[#allocation6 + $0x4] sm:$0xf]
    %v1083 = vld [vmem:[#allocation6 + $0x8] sm:$0xf]
    %v1084 = vld [vmem:[#allocation6 + $0xc] sm:$0xf]
    %v1085 = vld [vmem:[#allocation6 + $0x10] sm:$0xf]
    %v1086 = vld [vmem:[#allocation6 + $0x14] sm:$0xf]
    %v1087 = vld [vmem:[#allocation6 + $0x18] sm:$0xf]
    %v1088 = vld [vmem:[#allocation6 + $0x1c] sm:$0xf]
    %v1089 = vld [vmem:[#allocation6 + $0x20] sm:$0xf]
    %v1090 = vld [vmem:[#allocation6 + $0x24] sm:$0xf]
    %v1091 = vld [vmem:[#allocation6 + $0x28] sm:$0xf]
    %v1092 = vld [vmem:[#allocation6 + $0x2c] sm:$0xf]
    %v1093 = vld [vmem:[#allocation6 + $0x30] sm:$0xf]
    %v1094 = vld [vmem:[#allocation6 + $0x34] sm:$0xf]
    %v1095 = vld [vmem:[#allocation6 + $0x38] sm:$0xf]
    %v1096 = vld [vmem:[#allocation6 + $0x3c] sm:$0xf]
    %v1097 = vld [vmem:[#allocation6 + $0x40] sm:$0xf]
    %v1098 = vld [vmem:[#allocation6 + $0x44] sm:$0xf]
    %v1099 = vld [vmem:[#allocation6 + $0x48] sm:$0xf]
    %v1100 = vld [vmem:[#allocation6 + $0x4c] sm:$0xf]
    %v1101 = vld [vmem:[#allocation6 + $0x50] sm:$0xf]
    %v1102 = vld [vmem:[#allocation6 + $0x54] sm:$0xf]
    %v1103 = vld [vmem:[#allocation6 + $0x58] sm:$0xf]
    %v1104 = vld [vmem:[#allocation6 + $0x5c] sm:$0xf]
    %v1105 = vld [vmem:[#allocation6 + $0x60] sm:$0xf]
    %v1106 = vld [vmem:[#allocation6 + $0x64] sm:$0xf]
    %v1107 = vld [vmem:[#allocation6 + $0x68] sm:$0xf]
    %v1108 = vld [vmem:[#allocation6 + $0x6c] sm:$0xf]
    %v1109 = vld [vmem:[#allocation6 + $0x70] sm:$0xf]
    %v1110 = vld [vmem:[#allocation6 + $0x74] sm:$0xf]
    %v1111 = vld [vmem:[#allocation6 + $0x78] sm:$0xf]
    %v1112 = vld [vmem:[#allocation6 + $0x7c] sm:$0xf]
    %v1113 = vld [vmem:[#allocation6 + $0x80] sm:$0xf]
    %v1114 = vld [vmem:[#allocation6 + $0x84] sm:$0xf]
    %v1115 = vld [vmem:[#allocation6 + $0x88] sm:$0xf]
    %v1116 = vld [vmem:[#allocation6 + $0x8c] sm:$0xf]
    %v1117 = vld [vmem:[#allocation6 + $0x90] sm:$0xf]
    %v1118 = vld [vmem:[#allocation6 + $0x94] sm:$0xf]
    %v1119 = vld [vmem:[#allocation6 + $0x98] sm:$0xf]
    %v1120 = vld [vmem:[#allocation6 + $0x9c] sm:$0xf]
    %v1121 = vld [vmem:[#allocation6 + $0xa0] sm:$0xf]
    %v1122 = vld [vmem:[#allocation6 + $0xa4] sm:$0xf]
    %v1123 = vld [vmem:[#allocation6 + $0xa8] sm:$0xf]
    %v1124 = vld [vmem:[#allocation6 + $0xac] sm:$0xf]
    %v1125 = vld [vmem:[#allocation6 + $0xb0] sm:$0xf]
    %v1126 = vld [vmem:[#allocation6 + $0xb4] sm:$0xf]
    %v1127 = vld [vmem:[#allocation6 + $0xb8] sm:$0xf]
    %v1128 = vld [vmem:[#allocation6 + $0xbc] sm:$0xf]
    %v1129 = vld [vmem:[%s6] sm:$0x1]
    %v1131 = vlaneseq
    %v1132 = vshrl.u32 %v1131, 7
    %v1133 = vsub.s32 0, %v1132
    %v1134 = vrot.slane %v1129, %v1133
    %v1184 = vunpack.c.l.b16 %v1081
    %v1185 = vunpack.c.l.b16 %v1082
    %v1186 = vunpack.c.l.b16 %v1083
    %v1187 = vunpack.c.l.b16 %v1084
    %v1188 = vunpack.c.l.b16 %v1085
    %v1189 = vunpack.c.l.b16 %v1086
    %v1190 = vunpack.c.l.b16 %v1087
    %v1191 = vunpack.c.l.b16 %v1088
    %v1192 = vunpack.c.l.b16 %v1089
    %v1193 = vunpack.c.l.b16 %v1090
    %v1194 = vunpack.c.l.b16 %v1091
    %v1195 = vunpack.c.l.b16 %v1092
    %v1196 = vunpack.c.l.b16 %v1093
    %v1197 = vunpack.c.l.b16 %v1094
    %v1198 = vunpack.c.l.b16 %v1095
    %v1199 = vunpack.c.l.b16 %v1096
    %v1200 = vunpack.c.l.b16 %v1097
    %v1201 = vunpack.c.l.b16 %v1098
    %v1202 = vunpack.c.l.b16 %v1099
    %v1203 = vunpack.c.l.b16 %v1100
    %v1204 = vunpack.c.l.b16 %v1101
    %v1205 = vunpack.c.l.b16 %v1102
    %v1206 = vunpack.c.l.b16 %v1103
    %v1207 = vunpack.c.l.b16 %v1104
    %v1208 = vunpack.c.l.b16 %v1105
    %v1209 = vunpack.c.l.b16 %v1106
    %v1210 = vunpack.c.l.b16 %v1107
    %v1211 = vunpack.c.l.b16 %v1108
    %v1212 = vunpack.c.l.b16 %v1109
    %v1213 = vunpack.c.l.b16 %v1110
    %v1214 = vunpack.c.l.b16 %v1111
    %v1215 = vunpack.c.l.b16 %v1112
    %v1216 = vunpack.c.l.b16 %v1113
    %v1217 = vunpack.c.l.b16 %v1114
    %v1218 = vunpack.c.l.b16 %v1115
    %v1219 = vunpack.c.l.b16 %v1116
    %v1220 = vunpack.c.l.b16 %v1117
    %v1221 = vunpack.c.l.b16 %v1118
    %v1222 = vunpack.c.l.b16 %v1119
    %v1223 = vunpack.c.l.b16 %v1120
    %v1224 = vunpack.c.l.b16 %v1121
    %v1225 = vunpack.c.l.b16 %v1122
    %v1226 = vunpack.c.l.b16 %v1123
    %v1227 = vunpack.c.l.b16 %v1124
    %v1228 = vunpack.c.l.b16 %v1125
    %v1229 = vunpack.c.l.b16 %v1126
    %v1230 = vunpack.c.l.b16 %v1127
    %v1231 = vunpack.c.l.b16 %v1128
    %v1232 = vpack.c.b16 %v1185, %v1184
    %v1233 = vpack.c.b16 %v1187, %v1186
    %v1234 = vpack.c.b16 %v1189, %v1188
    %v1235 = vpack.c.b16 %v1191, %v1190
    %v1236 = vpack.c.b16 %v1193, %v1192
    %v1237 = vpack.c.b16 %v1195, %v1194
    %v1238 = vpack.c.b16 %v1197, %v1196
    %v1239 = vpack.c.b16 %v1199, %v1198
    %v1240 = vpack.c.b16 %v1201, %v1200
    %v1241 = vpack.c.b16 %v1203, %v1202
    %v1242 = vpack.c.b16 %v1205, %v1204
    %v1243 = vpack.c.b16 %v1207, %v1206
    %v1244 = vpack.c.b16 %v1209, %v1208
    %v1245 = vpack.c.b16 %v1211, %v1210
    %v1246 = vpack.c.b16 %v1213, %v1212
    %v1247 = vpack.c.b16 %v1215, %v1214
    %v1248 = vpack.c.b16 %v1217, %v1216
    %v1249 = vpack.c.b16 %v1219, %v1218
    %v1250 = vpack.c.b16 %v1221, %v1220
    %v1251 = vpack.c.b16 %v1223, %v1222
    %v1252 = vpack.c.b16 %v1225, %v1224
    %v1253 = vpack.c.b16 %v1227, %v1226
    %v1254 = vpack.c.b16 %v1229, %v1228
    %v1255 = vpack.c.b16 %v1231, %v1230
    %1280 = vmatprep.subr.bf16.mxu0 0
    %1281 = vmatpush1.bf16.msra.mxu0 %v1232
    %1282 = vmatprep.subr.bf16.mxu0 0
    %1283 = vmatpush1.bf16.msra.mxu0 %v1233
    %1284 = vmatprep.subr.bf16.mxu0 0
    %1285 = vmatpush1.bf16.msra.mxu0 %v1234
    %1286 = vmatprep.subr.bf16.mxu0 0
    %1287 = vmatpush1.bf16.msra.mxu0 %v1235
    %1288 = vmatprep.subr.bf16.mxu0 0
    %1289 = vmatpush1.bf16.msra.mxu0 %v1236
    %1290 = vmatprep.subr.bf16.mxu0 0
    %1291 = vmatpush1.bf16.msra.mxu0 %v1237
    %1292 = vmatprep.subr.bf16.mxu0 0
    %1293 = vmatpush1.bf16.msra.mxu0 %v1238
    %1294 = vmatprep.subr.bf16.mxu0 0
    %1295 = vmatpush1.bf16.msra.mxu0 %v1239
    %1296 = vmatprep.subr.bf16.mxu0 0
    %1297 = vmatpush1.bf16.msra.mxu0 %v1240
    %1298 = vmatprep.subr.bf16.mxu0 0
    %1299 = vmatpush1.bf16.msra.mxu0 %v1241
    %1300 = vmatprep.subr.bf16.mxu0 0
    %1301 = vmatpush1.bf16.msra.mxu0 %v1242
    %1302 = vmatprep.subr.bf16.mxu0 0
    %1303 = vmatpush1.bf16.msra.mxu0 %v1243
    %1304 = vmatprep.subr.bf16.mxu0 0
    %1305 = vmatpush1.bf16.msra.mxu0 %v1244
    %1306 = vmatprep.subr.bf16.mxu0 0
    %1307 = vmatpush1.bf16.msra.mxu0 %v1245
    %1308 = vmatprep.subr.bf16.mxu0 0
    %1309 = vmatpush1.bf16.msra.mxu0 %v1246
    %1310 = vmatprep.subr.bf16.mxu0 0
    %1311 = vmatpush1.bf16.msra.mxu0 %v1247
    %1312 = vmatprep.mubr.bf16.mxu0 %v1079
    %1313 = vmatmul.mubr.bf16.gmra.mrb[0].mxu0 %v1078
    %v1314 = vpop.f32.mrb[0].mxu0
    %v1315 = vadd.f32 %v1134, %v1314
    %v1316 = vpop.f32.mrb[0].mxu0
    %v1317 = vpop.f32.mrb[0].mxu0
    %v1318 = vadd.f32 %v1134, %v1317
    %v1319 = vpop.f32.mrb[0].mxu0
    %1320 = vdwg.mxu0
    %1321 = vmatprep.subr.bf16.mxu0 0
    %1322 = vmatpush1.bf16.msra.mxu0 %v1248
    %1323 = vmatprep.subr.bf16.mxu0 0
    %1324 = vmatpush1.bf16.msra.mxu0 %v1249
    %1325 = vmatprep.subr.bf16.mxu0 0
    %1326 = vmatpush1.bf16.msra.mxu0 %v1250
    %1327 = vmatprep.subr.bf16.mxu0 0
    %1328 = vmatpush1.bf16.msra.mxu0 %v1251
    %1329 = vmatprep.subr.bf16.mxu0 0
    %1330 = vmatpush1.bf16.msra.mxu0 %v1252
    %1331 = vmatprep.subr.bf16.mxu0 0
    %1332 = vmatpush1.bf16.msra.mxu0 %v1253
    %1333 = vmatprep.subr.bf16.mxu0 0
    %1334 = vmatpush1.bf16.msra.mxu0 %v1254
    %1335 = vmatprep.subr.bf16.mxu0 0
    %1336 = vmatpush1.bf16.msra.mxu0 %v1255
    %1337 = vmatprep.subr.bf16.mxu0 0
    %1338 = vmatpush1.bf16.msra.mxu0 0
    %1339 = vmatprep.subr.bf16.mxu0 0
    %1340 = vmatpush1.bf16.msra.mxu0 0
    %1341 = vmatprep.subr.bf16.mxu0 0
    %1342 = vmatpush1.bf16.msra.mxu0 0
    %1343 = vmatprep.subr.bf16.mxu0 0
    %1344 = vmatpush1.bf16.msra.mxu0 0
    %1345 = vmatprep.subr.bf16.mxu0 0
    %1346 = vmatpush1.bf16.msra.mxu0 0
    %1347 = vmatprep.subr.bf16.mxu0 0
    %1348 = vmatpush1.bf16.msra.mxu0 0
    %1349 = vmatprep.subr.bf16.mxu0 0
    %1350 = vmatpush1.bf16.msra.mxu0 0
    %1351 = vmatprep.subr.bf16.mxu0 0
    %1352 = vmatpush1.bf16.msra.mxu0 0
    %1353 = vmatprep.mubr.bf16.mxu0 0
    %1354 = vmatmul.mubr.bf16.gmra.mrb[0].mxu0 %v1080
    %v1355 = vpop.f32.mrb[0].mxu0
    %v1356 = vadd.f32 %v1315, %v1355
    %v1357 = vpop.f32.mrb[0].mxu0
    %v1358 = vpop.f32.mrb[0].mxu0
    %v1359 = vadd.f32 %v1318, %v1358
    %v1360 = vpop.f32.mrb[0].mxu0
    %1361 = vdwg.mxu0
    %v1362 = vtanh.pop %v1356
    %v1363 = vtanh.pop %v1359
    %v1364 = vmul.f32 %v1362, 2.0
    %v1365 = vmul.f32 %v1363, 2.0
    %1366 = vst [vmem:[%s7] sm:$0xff] %v1364
    %1367 = vst [vmem:[%s7 + $0x8] sm:$0xff] %v1365
    // Predicated region
    $region42: #{actor_forward.1} parent=1 // pred_check
      _
    $region43: #{actor_forward.1} parent=1 // pred_check_branch
      %1369 = sbr.rel (0) target = $region45
    $region44: #{actor_forward.1} parent=1 // pred_region
      _
    $region45: #{actor_forward.1} parent=1 // pred_fallthru
      _
    // Predicated region
    $region46: #{actor_forward.1} parent=1 // pred_check
      _
    $region47: #{actor_forward.1} parent=1 // pred_check_branch
      %1371 = sbr.rel (0) target = $region49
    $region48: #{actor_forward.1} parent=1 // pred_region
      _
    $region49: #{actor_forward.1} parent=1 // pred_fallthru
      _
    %1372 = vsyncpa [#allocation3], 1
    %1373 = vsyncpa [#allocation5], 1

</llo_original>
